<compile_context>
chip_gen: v7x
topology: tpu7x:2x2x1
jax: 0.10.0
libtpu: 0.0.40
codegen_flags: <defaults>
</compile_context>

<pallas_src>
import jax
import jax.numpy as jnp
from jax import lax
from jax.experimental import pallas as pl
from jax.experimental.pallas import tpu as pltpu


def num_encoder_gru_kernel(x_ref, w_ih_ref, w_hr_ref, w_hz_ref, w_hn_ref,
                           b_gi_ref, b_hn_ref, out_ref, hN_ref):
    TB, _ = x_ref.shape
    H = w_hr_ref.shape[0]
    B = hN_ref.shape[0]
    T = TB // B

    # --- Prologue (off the sequential critical path) -------------------------
    # All T timesteps' input-to-hidden projections in one MXU call.
    # b_gi already contains b_ir+b_hr, b_iz+b_hz, b_in.
    gi_all = jnp.dot(x_ref[...], w_ih_ref[...],
                     preferred_element_type=jnp.float32) + b_gi_ref[...]
    # Slice the gates once here (2 cheap lane extracts total, not per step).
    i_r_all = gi_all[:, 0:H]
    i_z_all = gi_all[:, H:2 * H]
    i_n_all = gi_all[:, 2 * H:3 * H]

    w_hr = w_hr_ref[...]
    w_hz = w_hz_ref[...]
    w_hn = w_hn_ref[...]
    b_hn = b_hn_ref[...]

    # --- Recurrence (statically unrolled; T is tiny and known at trace time) -
    h = jnp.zeros((B, H), jnp.float32)
    for t in range(T):
        lo, hi = t * B, (t + 1) * B            # static sublane slices
        gh_r = jnp.dot(h, w_hr, preferred_element_type=jnp.float32)
        gh_z = jnp.dot(h, w_hz, preferred_element_type=jnp.float32)
        gh_n = jnp.dot(h, w_hn, preferred_element_type=jnp.float32)
        r = jax.nn.sigmoid(i_r_all[lo:hi] + gh_r)
        z = jax.nn.sigmoid(i_z_all[lo:hi] + gh_z)
        n = jnp.tanh(i_n_all[lo:hi] + r * (gh_n + b_hn))
        h = n + z * (h - n)                    # == (1-z)*n + z*h
        # Lane-dense resident output slab: column block t of (B, T*H).
        out_ref[:, t * H:(t + 1) * H] = h

    hN_ref[...] = h                            # final hidden, written exactly once


def num_encoder_forward(input_ids, emb, w_ih, w_hh, b_ih, b_hh):
    """input_ids: (B, T) int32. Returns (out (B,T,H), hidden (1,B,H)) like nn.GRU."""
    B, T = input_ids.shape
    V, E = emb.shape
    H = w_hh.shape[0]
    H3 = 3 * H

    # Embedding lookup as a plain XLA gather in the wrapper (keeps V out of the
    # kernel / VMEM). Rows are laid out time-major: row t*B + b.
    x_tb = emb[input_ids.T.astype(jnp.int32)].reshape(T * B, E)

    # Split hidden-to-hidden weights per gate: no in-loop lane slicing of gh.
    w_hr = w_hh[:, 0:H]
    w_hz = w_hh[:, H:2 * H]
    w_hn = w_hh[:, 2 * H:3 * H]

    # Fuse r/z biases into the prologue bias; b_hn must stay separate
    # (it lives inside r * (h @ W_hn + b_hn)).
    b_gi = jnp.concatenate([b_ih[:2 * H] + b_hh[:2 * H], b_ih[2 * H:]]).reshape(1, H3)
    b_hn = b_hh[2 * H:].reshape(1, H)

    out_flat, h_last = pl.pallas_call(
        num_encoder_gru_kernel,
        out_shape=(
            jax.ShapeDtypeStruct((B, T * H), jnp.float32),   # lane-dense output slab
            jax.ShapeDtypeStruct((B, H), jnp.float32),       # final hidden
        ),
        grid=(1,),
        in_specs=[
            pl.BlockSpec((T * B, E), lambda i: (0, 0)),      # embedded tokens, time-major
            pl.BlockSpec((E, H3), lambda i: (0, 0)),         # W_ih^T   [r|z|n]
            pl.BlockSpec((H, H), lambda i: (0, 0)),          # W_hr^T
            pl.BlockSpec((H, H), lambda i: (0, 0)),          # W_hz^T
            pl.BlockSpec((H, H), lambda i: (0, 0)),          # W_hn^T
            pl.BlockSpec((1, H3), lambda i: (0, 0)),         # fused prologue bias
            pl.BlockSpec((1, H), lambda i: (0, 0)),          # b_hn
        ],
        out_specs=(
            pl.BlockSpec((B, T * H), lambda i: (0, 0)),
            pl.BlockSpec((B, H), lambda i: (0, 0)),
        ),
        compiler_params=pltpu.CompilerParams(
            dimension_semantics=("arbitrary",)),             # recurrence is sequential
    )(x_tb, w_ih, w_hr, w_hz, w_hn, b_gi, b_hn)

    out = out_flat.reshape(B, T, H)      # batch_first, matches nn.GRU(batch_first=True)
    hidden = h_last.reshape(1, B, H)     # (num_layers=1, B, H)
    return out, hidden


def num_encoder_reference(input_ids, emb, w_ih, w_hh, b_ih, b_hh):
    """Pure-JAX reference matching torch.nn.GRU(batch_first=True) semantics."""
    x = emb[input_ids]                   # (B, T, E)
    B, T, E = x.shape
    H = w_hh.shape[0]

    def step(h, x_t):
        gi = x_t @ w_ih + b_ih
        gh = h @ w_hh + b_hh
        i_r, i_z, i_n = gi[:, :H], gi[:, H:2 * H], gi[:, 2 * H:]
        h_r, h_z, h_n = gh[:, :H], gh[:, H:2 * H], gh[:, 2 * H:]
        r = jax.nn.sigmoid(i_r + h_r)
        z = jax.nn.sigmoid(i_z + h_z)
        n = jnp.tanh(i_n + r * h_n)
        h_new = (1.0 - z) * n + z * h
        return h_new, h_new

    h0 = jnp.zeros((B, H), jnp.float32)
    h_last, outs = lax.scan(step, h0, jnp.transpose(x, (1, 0, 2)))
    return jnp.transpose(outs, (1, 0, 2)), h_last[None]


if __name__ == "__main__":
    # config: vocab_size=16, embedding_dim=32, hidden_size=32
    B, T = 2, 8
    V, E, H = 16, 32, 32

    key = jax.random.PRNGKey(0)
    k_ids, k_emb, k_wi, k_wh, k_bi, k_bh = jax.random.split(key, 6)

    input_ids = jax.random.randint(k_ids, (B, T), 0, V, dtype=jnp.int32)

    # Deterministic parameter init (PyTorch-like scales).
    emb = jax.random.normal(k_emb, (V, E), jnp.float32)                      # nn.Embedding ~ N(0,1)
    bound = 1.0 / jnp.sqrt(jnp.float32(H))
    w_ih = jax.random.uniform(k_wi, (E, 3 * H), jnp.float32, -bound, bound)  # W_ih^T
    w_hh = jax.random.uniform(k_wh, (H, 3 * H), jnp.float32, -bound, bound)  # W_hh^T
    b_ih = jax.random.uniform(k_bi, (3 * H,), jnp.float32, -bound, bound)
    b_hh = jax.random.uniform(k_bh, (3 * H,), jnp.float32, -bound, bound)

    out, hidden = num_encoder_forward(input_ids, emb, w_ih, w_hh, b_ih, b_hh)
    out, hidden = jax.block_until_ready((out, hidden))

    out_ref, hidden_ref = num_encoder_reference(input_ids, emb, w_ih, w_hh, b_ih, b_hh)

    assert out.shape == (B, T, H) and hidden.shape == (1, B, H)
    assert jnp.allclose(out, out_ref, atol=1e-5, rtol=1e-5)
    assert jnp.allclose(hidden, hidden_ref, atol=1e-5, rtol=1e-5)

    print("KERNEL_OK")
</pallas_src>

<mosaic_0001>
module attributes {stable_mosaic.version = 11 : i64} {
  func.func @num_encoder_gru_kernel(%arg0: i32, %arg1: memref<16x32xf32, #tpu.memory_space<vmem>>, %arg2: memref<32x96xf32, #tpu.memory_space<vmem>>, %arg3: memref<32x32xf32, #tpu.memory_space<vmem>>, %arg4: memref<32x32xf32, #tpu.memory_space<vmem>>, %arg5: memref<32x32xf32, #tpu.memory_space<vmem>>, %arg6: memref<1x96xf32, #tpu.memory_space<vmem>>, %arg7: memref<1x32xf32, #tpu.memory_space<vmem>>, %arg8: memref<2x256xf32, #tpu.memory_space<vmem>>, %arg9: memref<2x32xf32, #tpu.memory_space<vmem>>) attributes {dimension_semantics = [#tpu.dimension_semantics<arbitrary>], iteration_bounds = array<i64: 1>, scalar_prefetch = 0 : i64, scratch_operands = 0 : i64, tpu.core_type = #tpu.core_type<tc>, window_params = [{pipeline_mode = #tpu.pipeline_mode<synchronous>, transform_indices = @transform_0, window_bounds = array<i64: 16, 32>}, {pipeline_mode = #tpu.pipeline_mode<synchronous>, transform_indices = @transform_1, window_bounds = array<i64: 32, 96>}, {pipeline_mode = #tpu.pipeline_mode<synchronous>, transform_indices = @transform_2, window_bounds = array<i64: 32, 32>}, {pipeline_mode = #tpu.pipeline_mode<synchronous>, transform_indices = @transform_3, window_bounds = array<i64: 32, 32>}, {pipeline_mode = #tpu.pipeline_mode<synchronous>, transform_indices = @transform_4, window_bounds = array<i64: 32, 32>}, {pipeline_mode = #tpu.pipeline_mode<synchronous>, transform_indices = @transform_5, window_bounds = array<i64: 1, 96>}, {pipeline_mode = #tpu.pipeline_mode<synchronous>, transform_indices = @transform_6, window_bounds = array<i64: 1, 32>}, {pipeline_mode = #tpu.pipeline_mode<synchronous>, transform_indices = @transform_7, window_bounds = array<i64: 2, 256>}, {pipeline_mode = #tpu.pipeline_mode<synchronous>, transform_indices = @transform_8, window_bounds = array<i64: 2, 32>}]} {
    %c0 = arith.constant 0 : index
    %c0_0 = arith.constant 0 : index
    %0 = vector.load %arg1[%c0, %c0_0] : memref<16x32xf32, #tpu.memory_space<vmem>>, vector<16x32xf32>
    %c0_1 = arith.constant 0 : index
    %c0_2 = arith.constant 0 : index
    %1 = vector.load %arg2[%c0_1, %c0_2] : memref<32x96xf32, #tpu.memory_space<vmem>>, vector<32x96xf32>
    %cst = arith.constant dense<0.000000e+00> : vector<16x96xf32>
    %2 = tpu.matmul %0, %1, %cst {dimension_numbers = #tpu.dot_dimension_numbers<[1], [0], [0], [1], [0, 0, 1, 1], [], []>} : vector<16x32xf32>, vector<32x96xf32>, vector<16x96xf32> -> vector<16x96xf32>
    %c0_3 = arith.constant 0 : index
    %c0_4 = arith.constant 0 : index
    %3 = vector.load %arg6[%c0_3, %c0_4] : memref<1x96xf32, #tpu.memory_space<vmem>>, vector<1x96xf32>
    %4 = vector.broadcast %3 : vector<1x96xf32> to vector<16x96xf32>
    %5 = arith.addf %2, %4 : vector<16x96xf32>
    %6 = vector.extract_strided_slice %5 {offsets = [0, 0], sizes = [16, 32], strides = [1, 1]} : vector<16x96xf32> to vector<16x32xf32>
    %7 = vector.extract_strided_slice %5 {offsets = [0, 32], sizes = [16, 32], strides = [1, 1]} : vector<16x96xf32> to vector<16x32xf32>
    %8 = vector.extract_strided_slice %5 {offsets = [0, 64], sizes = [16, 32], strides = [1, 1]} : vector<16x96xf32> to vector<16x32xf32>
    %c0_5 = arith.constant 0 : index
    %c0_6 = arith.constant 0 : index
    %9 = vector.load %arg3[%c0_5, %c0_6] : memref<32x32xf32, #tpu.memory_space<vmem>>, vector<32x32xf32>
    %c0_7 = arith.constant 0 : index
    %c0_8 = arith.constant 0 : index
    %10 = vector.load %arg4[%c0_7, %c0_8] : memref<32x32xf32, #tpu.memory_space<vmem>>, vector<32x32xf32>
    %c0_9 = arith.constant 0 : index
    %c0_10 = arith.constant 0 : index
    %11 = vector.load %arg5[%c0_9, %c0_10] : memref<32x32xf32, #tpu.memory_space<vmem>>, vector<32x32xf32>
    %c0_11 = arith.constant 0 : index
    %c0_12 = arith.constant 0 : index
    %12 = vector.load %arg7[%c0_11, %c0_12] : memref<1x32xf32, #tpu.memory_space<vmem>>, vector<1x32xf32>
    %cst_13 = arith.constant 0.000000e+00 : f32
    %13 = vector.broadcast %cst_13 : f32 to vector<2x32xf32>
    %cst_14 = arith.constant dense<0.000000e+00> : vector<2x32xf32>
    %14 = tpu.matmul %13, %9, %cst_14 {dimension_numbers = #tpu.dot_dimension_numbers<[1], [0], [0], [1], [0, 0, 1, 1], [], []>} : vector<2x32xf32>, vector<32x32xf32>, vector<2x32xf32> -> vector<2x32xf32>
    %cst_15 = arith.constant dense<0.000000e+00> : vector<2x32xf32>
    %15 = tpu.matmul %13, %10, %cst_15 {dimension_numbers = #tpu.dot_dimension_numbers<[1], [0], [0], [1], [0, 0, 1, 1], [], []>} : vector<2x32xf32>, vector<32x32xf32>, vector<2x32xf32> -> vector<2x32xf32>
    %cst_16 = arith.constant dense<0.000000e+00> : vector<2x32xf32>
    %16 = tpu.matmul %13, %11, %cst_16 {dimension_numbers = #tpu.dot_dimension_numbers<[1], [0], [0], [1], [0, 0, 1, 1], [], []>} : vector<2x32xf32>, vector<32x32xf32>, vector<2x32xf32> -> vector<2x32xf32>
    %17 = vector.extract_strided_slice %6 {offsets = [0, 0], sizes = [2, 32], strides = [1, 1]} : vector<16x32xf32> to vector<2x32xf32>
    %18 = arith.addf %17, %14 : vector<2x32xf32>
    %19 = arith.negf %18 : vector<2x32xf32>
    %20 = math.exp %19 : vector<2x32xf32>
    %cst_17 = arith.constant 1.000000e+00 : f32
    %21 = vector.broadcast %cst_17 : f32 to vector<2x32xf32>
    %22 = arith.addf %21, %20 : vector<2x32xf32>
    %23 = arith.divf %21, %22 : vector<2x32xf32>
    %24 = vector.extract_strided_slice %7 {offsets = [0, 0], sizes = [2, 32], strides = [1, 1]} : vector<16x32xf32> to vector<2x32xf32>
    %25 = arith.addf %24, %15 : vector<2x32xf32>
    %26 = arith.negf %25 : vector<2x32xf32>
    %27 = math.exp %26 : vector<2x32xf32>
    %cst_18 = arith.constant 1.000000e+00 : f32
    %28 = vector.broadcast %cst_18 : f32 to vector<2x32xf32>
    %29 = arith.addf %28, %27 : vector<2x32xf32>
    %30 = arith.divf %28, %29 : vector<2x32xf32>
    %31 = vector.extract_strided_slice %8 {offsets = [0, 0], sizes = [2, 32], strides = [1, 1]} : vector<16x32xf32> to vector<2x32xf32>
    %32 = vector.broadcast %12 : vector<1x32xf32> to vector<2x32xf32>
    %33 = arith.addf %16, %32 : vector<2x32xf32>
    %34 = arith.mulf %23, %33 : vector<2x32xf32>
    %35 = arith.addf %31, %34 : vector<2x32xf32>
    %36 = math.tanh %35 : vector<2x32xf32>
    %37 = arith.subf %13, %36 : vector<2x32xf32>
    %38 = arith.mulf %30, %37 : vector<2x32xf32>
    %39 = arith.addf %36, %38 : vector<2x32xf32>
    %c0_19 = arith.constant 0 : index
    %c0_20 = arith.constant 0 : index
    %40 = vector.load %arg8[%c0_19, %c0_20] : memref<2x256xf32, #tpu.memory_space<vmem>>, vector<2x32xf32>
    tpu.vector_store %arg8[%c0_19, %c0_20], %39 {strides = array<i32>} : memref<2x256xf32, #tpu.memory_space<vmem>>, vector<2x32xf32>,
    %cst_21 = arith.constant dense<0.000000e+00> : vector<2x32xf32>
    %41 = tpu.matmul %39, %9, %cst_21 {dimension_numbers = #tpu.dot_dimension_numbers<[1], [0], [0], [1], [0, 0, 1, 1], [], []>} : vector<2x32xf32>, vector<32x32xf32>, vector<2x32xf32> -> vector<2x32xf32>
    %cst_22 = arith.constant dense<0.000000e+00> : vector<2x32xf32>
    %42 = tpu.matmul %39, %10, %cst_22 {dimension_numbers = #tpu.dot_dimension_numbers<[1], [0], [0], [1], [0, 0, 1, 1], [], []>} : vector<2x32xf32>, vector<32x32xf32>, vector<2x32xf32> -> vector<2x32xf32>
    %cst_23 = arith.constant dense<0.000000e+00> : vector<2x32xf32>
    %43 = tpu.matmul %39, %11, %cst_23 {dimension_numbers = #tpu.dot_dimension_numbers<[1], [0], [0], [1], [0, 0, 1, 1], [], []>} : vector<2x32xf32>, vector<32x32xf32>, vector<2x32xf32> -> vector<2x32xf32>
    %44 = vector.extract_strided_slice %6 {offsets = [2, 0], sizes = [2, 32], strides = [1, 1]} : vector<16x32xf32> to vector<2x32xf32>
    %45 = arith.addf %44, %41 : vector<2x32xf32>
    %46 = arith.negf %45 : vector<2x32xf32>
    %47 = math.exp %46 : vector<2x32xf32>
    %cst_24 = arith.constant 1.000000e+00 : f32
    %48 = vector.broadcast %cst_24 : f32 to vector<2x32xf32>
    %49 = arith.addf %48, %47 : vector<2x32xf32>
    %50 = arith.divf %48, %49 : vector<2x32xf32>
    %51 = vector.extract_strided_slice %7 {offsets = [2, 0], sizes = [2, 32], strides = [1, 1]} : vector<16x32xf32> to vector<2x32xf32>
    %52 = arith.addf %51, %42 : vector<2x32xf32>
    %53 = arith.negf %52 : vector<2x32xf32>
    %54 = math.exp %53 : vector<2x32xf32>
    %cst_25 = arith.constant 1.000000e+00 : f32
    %55 = vector.broadcast %cst_25 : f32 to vector<2x32xf32>
    %56 = arith.addf %55, %54 : vector<2x32xf32>
    %57 = arith.divf %55, %56 : vector<2x32xf32>
    %58 = vector.extract_strided_slice %8 {offsets = [2, 0], sizes = [2, 32], strides = [1, 1]} : vector<16x32xf32> to vector<2x32xf32>
    %59 = vector.broadcast %12 : vector<1x32xf32> to vector<2x32xf32>
    %60 = arith.addf %43, %59 : vector<2x32xf32>
    %61 = arith.mulf %50, %60 : vector<2x32xf32>
    %62 = arith.addf %58, %61 : vector<2x32xf32>
    %63 = math.tanh %62 : vector<2x32xf32>
    %64 = arith.subf %39, %63 : vector<2x32xf32>
    %65 = arith.mulf %57, %64 : vector<2x32xf32>
    %66 = arith.addf %63, %65 : vector<2x32xf32>
    %c0_26 = arith.constant 0 : index
    %c32 = arith.constant 32 : index
    %67 = vector.load %arg8[%c0_26, %c32] : memref<2x256xf32, #tpu.memory_space<vmem>>, vector<2x32xf32>
    tpu.vector_store %arg8[%c0_26, %c32], %66 {strides = array<i32>} : memref<2x256xf32, #tpu.memory_space<vmem>>, vector<2x32xf32>,
    %cst_27 = arith.constant dense<0.000000e+00> : vector<2x32xf32>
    %68 = tpu.matmul %66, %9, %cst_27 {dimension_numbers = #tpu.dot_dimension_numbers<[1], [0], [0], [1], [0, 0, 1, 1], [], []>} : vector<2x32xf32>, vector<32x32xf32>, vector<2x32xf32> -> vector<2x32xf32>
    %cst_28 = arith.constant dense<0.000000e+00> : vector<2x32xf32>
    %69 = tpu.matmul %66, %10, %cst_28 {dimension_numbers = #tpu.dot_dimension_numbers<[1], [0], [0], [1], [0, 0, 1, 1], [], []>} : vector<2x32xf32>, vector<32x32xf32>, vector<2x32xf32> -> vector<2x32xf32>
    %cst_29 = arith.constant dense<0.000000e+00> : vector<2x32xf32>
    %70 = tpu.matmul %66, %11, %cst_29 {dimension_numbers = #tpu.dot_dimension_numbers<[1], [0], [0], [1], [0, 0, 1, 1], [], []>} : vector<2x32xf32>, vector<32x32xf32>, vector<2x32xf32> -> vector<2x32xf32>
    %71 = vector.extract_strided_slice %6 {offsets = [4, 0], sizes = [2, 32], strides = [1, 1]} : vector<16x32xf32> to vector<2x32xf32>
    %72 = arith.addf %71, %68 : vector<2x32xf32>
    %73 = arith.negf %72 : vector<2x32xf32>
    %74 = math.exp %73 : vector<2x32xf32>
    %cst_30 = arith.constant 1.000000e+00 : f32
    %75 = vector.broadcast %cst_30 : f32 to vector<2x32xf32>
    %76 = arith.addf %75, %74 : vector<2x32xf32>
    %77 = arith.divf %75, %76 : vector<2x32xf32>
    %78 = vector.extract_strided_slice %7 {offsets = [4, 0], sizes = [2, 32], strides = [1, 1]} : vector<16x32xf32> to vector<2x32xf32>
    %79 = arith.addf %78, %69 : vector<2x32xf32>
    %80 = arith.negf %79 : vector<2x32xf32>
    %81 = math.exp %80 : vector<2x32xf32>
    %cst_31 = arith.constant 1.000000e+00 : f32
    %82 = vector.broadcast %cst_31 : f32 to vector<2x32xf32>
    %83 = arith.addf %82, %81 : vector<2x32xf32>
    %84 = arith.divf %82, %83 : vector<2x32xf32>
    %85 = vector.extract_strided_slice %8 {offsets = [4, 0], sizes = [2, 32], strides = [1, 1]} : vector<16x32xf32> to vector<2x32xf32>
    %86 = vector.broadcast %12 : vector<1x32xf32> to vector<2x32xf32>
    %87 = arith.addf %70, %86 : vector<2x32xf32>
    %88 = arith.mulf %77, %87 : vector<2x32xf32>
    %89 = arith.addf %85, %88 : vector<2x32xf32>
    %90 = math.tanh %89 : vector<2x32xf32>
    %91 = arith.subf %66, %90 : vector<2x32xf32>
    %92 = arith.mulf %84, %91 : vector<2x32xf32>
    %93 = arith.addf %90, %92 : vector<2x32xf32>
    %c0_32 = arith.constant 0 : index
    %c64 = arith.constant 64 : index
    %94 = vector.load %arg8[%c0_32, %c64] : memref<2x256xf32, #tpu.memory_space<vmem>>, vector<2x32xf32>
    tpu.vector_store %arg8[%c0_32, %c64], %93 {strides = array<i32>} : memref<2x256xf32, #tpu.memory_space<vmem>>, vector<2x32xf32>,
    %cst_33 = arith.constant dense<0.000000e+00> : vector<2x32xf32>
    %95 = tpu.matmul %93, %9, %cst_33 {dimension_numbers = #tpu.dot_dimension_numbers<[1], [0], [0], [1], [0, 0, 1, 1], [], []>} : vector<2x32xf32>, vector<32x32xf32>, vector<2x32xf32> -> vector<2x32xf32>
    %cst_34 = arith.constant dense<0.000000e+00> : vector<2x32xf32>
    %96 = tpu.matmul %93, %10, %cst_34 {dimension_numbers = #tpu.dot_dimension_numbers<[1], [0], [0], [1], [0, 0, 1, 1], [], []>} : vector<2x32xf32>, vector<32x32xf32>, vector<2x32xf32> -> vector<2x32xf32>
    %cst_35 = arith.constant dense<0.000000e+00> : vector<2x32xf32>
    %97 = tpu.matmul %93, %11, %cst_35 {dimension_numbers = #tpu.dot_dimension_numbers<[1], [0], [0], [1], [0, 0, 1, 1], [], []>} : vector<2x32xf32>, vector<32x32xf32>, vector<2x32xf32> -> vector<2x32xf32>
    %98 = vector.extract_strided_slice %6 {offsets = [6, 0], sizes = [2, 32], strides = [1, 1]} : vector<16x32xf32> to vector<2x32xf32>
    %99 = arith.addf %98, %95 : vector<2x32xf32>
    %100 = arith.negf %99 : vector<2x32xf32>
    %101 = math.exp %100 : vector<2x32xf32>
    %cst_36 = arith.constant 1.000000e+00 : f32
    %102 = vector.broadcast %cst_36 : f32 to vector<2x32xf32>
    %103 = arith.addf %102, %101 : vector<2x32xf32>
    %104 = arith.divf %102, %103 : vector<2x32xf32>
    %105 = vector.extract_strided_slice %7 {offsets = [6, 0], sizes = [2, 32], strides = [1, 1]} : vector<16x32xf32> to vector<2x32xf32>
    %106 = arith.addf %105, %96 : vector<2x32xf32>
    %107 = arith.negf %106 : vector<2x32xf32>
    %108 = math.exp %107 : vector<2x32xf32>
    %cst_37 = arith.constant 1.000000e+00 : f32
    %109 = vector.broadcast %cst_37 : f32 to vector<2x32xf32>
    %110 = arith.addf %109, %108 : vector<2x32xf32>
    %111 = arith.divf %109, %110 : vector<2x32xf32>
    %112 = vector.extract_strided_slice %8 {offsets = [6, 0], sizes = [2, 32], strides = [1, 1]} : vector<16x32xf32> to vector<2x32xf32>
    %113 = vector.broadcast %12 : vector<1x32xf32> to vector<2x32xf32>
    %114 = arith.addf %97, %113 : vector<2x32xf32>
    %115 = arith.mulf %104, %114 : vector<2x32xf32>
    %116 = arith.addf %112, %115 : vector<2x32xf32>
    %117 = math.tanh %116 : vector<2x32xf32>
    %118 = arith.subf %93, %117 : vector<2x32xf32>
    %119 = arith.mulf %111, %118 : vector<2x32xf32>
    %120 = arith.addf %117, %119 : vector<2x32xf32>
    %c0_38 = arith.constant 0 : index
    %c96 = arith.constant 96 : index
    %121 = vector.load %arg8[%c0_38, %c96] : memref<2x256xf32, #tpu.memory_space<vmem>>, vector<2x32xf32>
    tpu.vector_store %arg8[%c0_38, %c96], %120 {strides = array<i32>} : memref<2x256xf32, #tpu.memory_space<vmem>>, vector<2x32xf32>,
    %cst_39 = arith.constant dense<0.000000e+00> : vector<2x32xf32>
    %122 = tpu.matmul %120, %9, %cst_39 {dimension_numbers = #tpu.dot_dimension_numbers<[1], [0], [0], [1], [0, 0, 1, 1], [], []>} : vector<2x32xf32>, vector<32x32xf32>, vector<2x32xf32> -> vector<2x32xf32>
    %cst_40 = arith.constant dense<0.000000e+00> : vector<2x32xf32>
    %123 = tpu.matmul %120, %10, %cst_40 {dimension_numbers = #tpu.dot_dimension_numbers<[1], [0], [0], [1], [0, 0, 1, 1], [], []>} : vector<2x32xf32>, vector<32x32xf32>, vector<2x32xf32> -> vector<2x32xf32>
    %cst_41 = arith.constant dense<0.000000e+00> : vector<2x32xf32>
    %124 = tpu.matmul %120, %11, %cst_41 {dimension_numbers = #tpu.dot_dimension_numbers<[1], [0], [0], [1], [0, 0, 1, 1], [], []>} : vector<2x32xf32>, vector<32x32xf32>, vector<2x32xf32> -> vector<2x32xf32>
    %125 = vector.extract_strided_slice %6 {offsets = [8, 0], sizes = [2, 32], strides = [1, 1]} : vector<16x32xf32> to vector<2x32xf32>
    %126 = arith.addf %125, %122 : vector<2x32xf32>
    %127 = arith.negf %126 : vector<2x32xf32>
    %128 = math.exp %127 : vector<2x32xf32>
    %cst_42 = arith.constant 1.000000e+00 : f32
    %129 = vector.broadcast %cst_42 : f32 to vector<2x32xf32>
    %130 = arith.addf %129, %128 : vector<2x32xf32>
    %131 = arith.divf %129, %130 : vector<2x32xf32>
    %132 = vector.extract_strided_slice %7 {offsets = [8, 0], sizes = [2, 32], strides = [1, 1]} : vector<16x32xf32> to vector<2x32xf32>
    %133 = arith.addf %132, %123 : vector<2x32xf32>
    %134 = arith.negf %133 : vector<2x32xf32>
    %135 = math.exp %134 : vector<2x32xf32>
    %cst_43 = arith.constant 1.000000e+00 : f32
    %136 = vector.broadcast %cst_43 : f32 to vector<2x32xf32>
    %137 = arith.addf %136, %135 : vector<2x32xf32>
    %138 = arith.divf %136, %137 : vector<2x32xf32>
    %139 = vector.extract_strided_slice %8 {offsets = [8, 0], sizes = [2, 32], strides = [1, 1]} : vector<16x32xf32> to vector<2x32xf32>
    %140 = vector.broadcast %12 : vector<1x32xf32> to vector<2x32xf32>
    %141 = arith.addf %124, %140 : vector<2x32xf32>
    %142 = arith.mulf %131, %141 : vector<2x32xf32>
    %143 = arith.addf %139, %142 : vector<2x32xf32>
    %144 = math.tanh %143 : vector<2x32xf32>
    %145 = arith.subf %120, %144 : vector<2x32xf32>
    %146 = arith.mulf %138, %145 : vector<2x32xf32>
    %147 = arith.addf %144, %146 : vector<2x32xf32>
    %c0_44 = arith.constant 0 : index
    %c128 = arith.constant 128 : index
    %148 = vector.load %arg8[%c0_44, %c128] : memref<2x256xf32, #tpu.memory_space<vmem>>, vector<2x32xf32>
    tpu.vector_store %arg8[%c0_44, %c128], %147 {strides = array<i32>} : memref<2x256xf32, #tpu.memory_space<vmem>>, vector<2x32xf32>,
    %cst_45 = arith.constant dense<0.000000e+00> : vector<2x32xf32>
    %149 = tpu.matmul %147, %9, %cst_45 {dimension_numbers = #tpu.dot_dimension_numbers<[1], [0], [0], [1], [0, 0, 1, 1], [], []>} : vector<2x32xf32>, vector<32x32xf32>, vector<2x32xf32> -> vector<2x32xf32>
    %cst_46 = arith.constant dense<0.000000e+00> : vector<2x32xf32>
    %150 = tpu.matmul %147, %10, %cst_46 {dimension_numbers = #tpu.dot_dimension_numbers<[1], [0], [0], [1], [0, 0, 1, 1], [], []>} : vector<2x32xf32>, vector<32x32xf32>, vector<2x32xf32> -> vector<2x32xf32>
    %cst_47 = arith.constant dense<0.000000e+00> : vector<2x32xf32>
    %151 = tpu.matmul %147, %11, %cst_47 {dimension_numbers = #tpu.dot_dimension_numbers<[1], [0], [0], [1], [0, 0, 1, 1], [], []>} : vector<2x32xf32>, vector<32x32xf32>, vector<2x32xf32> -> vector<2x32xf32>
    %152 = vector.extract_strided_slice %6 {offsets = [10, 0], sizes = [2, 32], strides = [1, 1]} : vector<16x32xf32> to vector<2x32xf32>
    %153 = arith.addf %152, %149 : vector<2x32xf32>
    %154 = arith.negf %153 : vector<2x32xf32>
    %155 = math.exp %154 : vector<2x32xf32>
    %cst_48 = arith.constant 1.000000e+00 : f32
    %156 = vector.broadcast %cst_48 : f32 to vector<2x32xf32>
    %157 = arith.addf %156, %155 : vector<2x32xf32>
    %158 = arith.divf %156, %157 : vector<2x32xf32>
    %159 = vector.extract_strided_slice %7 {offsets = [10, 0], sizes = [2, 32], strides = [1, 1]} : vector<16x32xf32> to vector<2x32xf32>
    %160 = arith.addf %159, %150 : vector<2x32xf32>
    %161 = arith.negf %160 : vector<2x32xf32>
    %162 = math.exp %161 : vector<2x32xf32>
    %cst_49 = arith.constant 1.000000e+00 : f32
    %163 = vector.broadcast %cst_49 : f32 to vector<2x32xf32>
    %164 = arith.addf %163, %162 : vector<2x32xf32>
    %165 = arith.divf %163, %164 : vector<2x32xf32>
    %166 = vector.extract_strided_slice %8 {offsets = [10, 0], sizes = [2, 32], strides = [1, 1]} : vector<16x32xf32> to vector<2x32xf32>
    %167 = vector.broadcast %12 : vector<1x32xf32> to vector<2x32xf32>
    %168 = arith.addf %151, %167 : vector<2x32xf32>
    %169 = arith.mulf %158, %168 : vector<2x32xf32>
    %170 = arith.addf %166, %169 : vector<2x32xf32>
    %171 = math.tanh %170 : vector<2x32xf32>
    %172 = arith.subf %147, %171 : vector<2x32xf32>
    %173 = arith.mulf %165, %172 : vector<2x32xf32>
    %174 = arith.addf %171, %173 : vector<2x32xf32>
    %c0_50 = arith.constant 0 : index
    %c160 = arith.constant 160 : index
    %175 = vector.load %arg8[%c0_50, %c160] : memref<2x256xf32, #tpu.memory_space<vmem>>, vector<2x32xf32>
    tpu.vector_store %arg8[%c0_50, %c160], %174 {strides = array<i32>} : memref<2x256xf32, #tpu.memory_space<vmem>>, vector<2x32xf32>,
    %cst_51 = arith.constant dense<0.000000e+00> : vector<2x32xf32>
    %176 = tpu.matmul %174, %9, %cst_51 {dimension_numbers = #tpu.dot_dimension_numbers<[1], [0], [0], [1], [0, 0, 1, 1], [], []>} : vector<2x32xf32>, vector<32x32xf32>, vector<2x32xf32> -> vector<2x32xf32>
    %cst_52 = arith.constant dense<0.000000e+00> : vector<2x32xf32>
    %177 = tpu.matmul %174, %10, %cst_52 {dimension_numbers = #tpu.dot_dimension_numbers<[1], [0], [0], [1], [0, 0, 1, 1], [], []>} : vector<2x32xf32>, vector<32x32xf32>, vector<2x32xf32> -> vector<2x32xf32>
    %cst_53 = arith.constant dense<0.000000e+00> : vector<2x32xf32>
    %178 = tpu.matmul %174, %11, %cst_53 {dimension_numbers = #tpu.dot_dimension_numbers<[1], [0], [0], [1], [0, 0, 1, 1], [], []>} : vector<2x32xf32>, vector<32x32xf32>, vector<2x32xf32> -> vector<2x32xf32>
    %179 = vector.extract_strided_slice %6 {offsets = [12, 0], sizes = [2, 32], strides = [1, 1]} : vector<16x32xf32> to vector<2x32xf32>
    %180 = arith.addf %179, %176 : vector<2x32xf32>
    %181 = arith.negf %180 : vector<2x32xf32>
    %182 = math.exp %181 : vector<2x32xf32>
    %cst_54 = arith.constant 1.000000e+00 : f32
    %183 = vector.broadcast %cst_54 : f32 to vector<2x32xf32>
    %184 = arith.addf %183, %182 : vector<2x32xf32>
    %185 = arith.divf %183, %184 : vector<2x32xf32>
    %186 = vector.extract_strided_slice %7 {offsets = [12, 0], sizes = [2, 32], strides = [1, 1]} : vector<16x32xf32> to vector<2x32xf32>
    %187 = arith.addf %186, %177 : vector<2x32xf32>
    %188 = arith.negf %187 : vector<2x32xf32>
    %189 = math.exp %188 : vector<2x32xf32>
    %cst_55 = arith.constant 1.000000e+00 : f32
    %190 = vector.broadcast %cst_55 : f32 to vector<2x32xf32>
    %191 = arith.addf %190, %189 : vector<2x32xf32>
    %192 = arith.divf %190, %191 : vector<2x32xf32>
    %193 = vector.extract_strided_slice %8 {offsets = [12, 0], sizes = [2, 32], strides = [1, 1]} : vector<16x32xf32> to vector<2x32xf32>
    %194 = vector.broadcast %12 : vector<1x32xf32> to vector<2x32xf32>
    %195 = arith.addf %178, %194 : vector<2x32xf32>
    %196 = arith.mulf %185, %195 : vector<2x32xf32>
    %197 = arith.addf %193, %196 : vector<2x32xf32>
    %198 = math.tanh %197 : vector<2x32xf32>
    %199 = arith.subf %174, %198 : vector<2x32xf32>
    %200 = arith.mulf %192, %199 : vector<2x32xf32>
    %201 = arith.addf %198, %200 : vector<2x32xf32>
    %c0_56 = arith.constant 0 : index
    %c192 = arith.constant 192 : index
    %202 = vector.load %arg8[%c0_56, %c192] : memref<2x256xf32, #tpu.memory_space<vmem>>, vector<2x32xf32>
    tpu.vector_store %arg8[%c0_56, %c192], %201 {strides = array<i32>} : memref<2x256xf32, #tpu.memory_space<vmem>>, vector<2x32xf32>,
    %cst_57 = arith.constant dense<0.000000e+00> : vector<2x32xf32>
    %203 = tpu.matmul %201, %9, %cst_57 {dimension_numbers = #tpu.dot_dimension_numbers<[1], [0], [0], [1], [0, 0, 1, 1], [], []>} : vector<2x32xf32>, vector<32x32xf32>, vector<2x32xf32> -> vector<2x32xf32>
    %cst_58 = arith.constant dense<0.000000e+00> : vector<2x32xf32>
    %204 = tpu.matmul %201, %10, %cst_58 {dimension_numbers = #tpu.dot_dimension_numbers<[1], [0], [0], [1], [0, 0, 1, 1], [], []>} : vector<2x32xf32>, vector<32x32xf32>, vector<2x32xf32> -> vector<2x32xf32>
    %cst_59 = arith.constant dense<0.000000e+00> : vector<2x32xf32>
    %205 = tpu.matmul %201, %11, %cst_59 {dimension_numbers = #tpu.dot_dimension_numbers<[1], [0], [0], [1], [0, 0, 1, 1], [], []>} : vector<2x32xf32>, vector<32x32xf32>, vector<2x32xf32> -> vector<2x32xf32>
    %206 = vector.extract_strided_slice %6 {offsets = [14, 0], sizes = [2, 32], strides = [1, 1]} : vector<16x32xf32> to vector<2x32xf32>
    %207 = arith.addf %206, %203 : vector<2x32xf32>
    %208 = arith.negf %207 : vector<2x32xf32>
    %209 = math.exp %208 : vector<2x32xf32>
    %cst_60 = arith.constant 1.000000e+00 : f32
    %210 = vector.broadcast %cst_60 : f32 to vector<2x32xf32>
    %211 = arith.addf %210, %209 : vector<2x32xf32>
    %212 = arith.divf %210, %211 : vector<2x32xf32>
    %213 = vector.extract_strided_slice %7 {offsets = [14, 0], sizes = [2, 32], strides = [1, 1]} : vector<16x32xf32> to vector<2x32xf32>
    %214 = arith.addf %213, %204 : vector<2x32xf32>
    %215 = arith.negf %214 : vector<2x32xf32>
    %216 = math.exp %215 : vector<2x32xf32>
    %cst_61 = arith.constant 1.000000e+00 : f32
    %217 = vector.broadcast %cst_61 : f32 to vector<2x32xf32>
    %218 = arith.addf %217, %216 : vector<2x32xf32>
    %219 = arith.divf %217, %218 : vector<2x32xf32>
    %220 = vector.extract_strided_slice %8 {offsets = [14, 0], sizes = [2, 32], strides = [1, 1]} : vector<16x32xf32> to vector<2x32xf32>
    %221 = vector.broadcast %12 : vector<1x32xf32> to vector<2x32xf32>
    %222 = arith.addf %205, %221 : vector<2x32xf32>
    %223 = arith.mulf %212, %222 : vector<2x32xf32>
    %224 = arith.addf %220, %223 : vector<2x32xf32>
    %225 = math.tanh %224 : vector<2x32xf32>
    %226 = arith.subf %201, %225 : vector<2x32xf32>
    %227 = arith.mulf %219, %226 : vector<2x32xf32>
    %228 = arith.addf %225, %227 : vector<2x32xf32>
    %c0_62 = arith.constant 0 : index
    %c224 = arith.constant 224 : index
    %229 = vector.load %arg8[%c0_62, %c224] : memref<2x256xf32, #tpu.memory_space<vmem>>, vector<2x32xf32>
    tpu.vector_store %arg8[%c0_62, %c224], %228 {strides = array<i32>} : memref<2x256xf32, #tpu.memory_space<vmem>>, vector<2x32xf32>,
    %c0_63 = arith.constant 0 : index
    %c0_64 = arith.constant 0 : index
    %230 = vector.load %arg9[%c0_63, %c0_64] : memref<2x32xf32, #tpu.memory_space<vmem>>, vector<2x32xf32>
    tpu.vector_store %arg9[%c0_63, %c0_64], %228 {strides = array<i32>} : memref<2x32xf32, #tpu.memory_space<vmem>>, vector<2x32xf32>,
    return
  }
  func.func @transform_0(%arg0: i32) -> (i32, i32) {
    %c0_i32 = arith.constant 0 : i32
    %c0_i32_0 = arith.constant 0 : i32
    %c0_i32_1 = arith.constant 0 : i32
    return %c0_i32, %c0_i32_0 : i32, i32
  }
  func.func @transform_1(%arg0: i32) -> (i32, i32) {
    %c0_i32 = arith.constant 0 : i32
    %c0_i32_0 = arith.constant 0 : i32
    %c0_i32_1 = arith.constant 0 : i32
    return %c0_i32, %c0_i32_0 : i32, i32
  }
  func.func @transform_2(%arg0: i32) -> (i32, i32) {
    %c0_i32 = arith.constant 0 : i32
    %c0_i32_0 = arith.constant 0 : i32
    %c0_i32_1 = arith.constant 0 : i32
    return %c0_i32, %c0_i32_0 : i32, i32
  }
  func.func @transform_3(%arg0: i32) -> (i32, i32) {
    %c0_i32 = arith.constant 0 : i32
    %c0_i32_0 = arith.constant 0 : i32
    %c0_i32_1 = arith.constant 0 : i32
    return %c0_i32, %c0_i32_0 : i32, i32
  }
  func.func @transform_4(%arg0: i32) -> (i32, i32) {
    %c0_i32 = arith.constant 0 : i32
    %c0_i32_0 = arith.constant 0 : i32
    %c0_i32_1 = arith.constant 0 : i32
    return %c0_i32, %c0_i32_0 : i32, i32
  }
  func.func @transform_5(%arg0: i32) -> (i32, i32) {
    %c0_i32 = arith.constant 0 : i32
    %c0_i32_0 = arith.constant 0 : i32
    %c0_i32_1 = arith.constant 0 : i32
    return %c0_i32, %c0_i32_0 : i32, i32
  }
  func.func @transform_6(%arg0: i32) -> (i32, i32) {
    %c0_i32 = arith.constant 0 : i32
    %c0_i32_0 = arith.constant 0 : i32
    %c0_i32_1 = arith.constant 0 : i32
    return %c0_i32, %c0_i32_0 : i32, i32
  }
  func.func @transform_7(%arg0: i32) -> (i32, i32) {
    %c0_i32 = arith.constant 0 : i32
    %c0_i32_0 = arith.constant 0 : i32
    %c0_i32_1 = arith.constant 0 : i32
    return %c0_i32, %c0_i32_0 : i32, i32
  }
  func.func @transform_8(%arg0: i32) -> (i32, i32) {
    %c0_i32 = arith.constant 0 : i32
    %c0_i32_0 = arith.constant 0 : i32
    %c0_i32_1 = arith.constant 0 : i32
    return %c0_i32, %c0_i32_0 : i32, i32
  }
}

</mosaic_0001>

<llo_original>
// kernel: tpu_custom_call.1
$region0: #{tpu_custom_call.1}
  #allocation0 [shape = 'u32[]', space=smem, size = 0x4, offset = 0x4, fixed_abs, tag = 'smem constant byte address 0x4 - core index']
  #allocation1 [shape = 'u32[144,128]{1,0:T(1,128)}', space=vmem, size = 0x12000, scoped, tag = 'internal scratch']
  %s0 = inlined_call_operand.hbm [shape: f32[16,32], index: 0, kind: input, shape index: {}]
  %s1 = inlined_call_operand.hbm [shape: f32[32,96], index: 1, kind: input, shape index: {}]
  %s2 = inlined_call_operand.hbm [shape: f32[32,32], index: 2, kind: input, shape index: {}]
  %s3 = inlined_call_operand.hbm [shape: f32[32,32], index: 3, kind: input, shape index: {}]
  %s4 = inlined_call_operand.hbm [shape: f32[32,32], index: 4, kind: input, shape index: {}]
  %s5 = inlined_call_operand.vmem [shape: f32[1,96], index: 5, kind: input, shape index: {}]
  %s6 = inlined_call_operand.vmem [shape: f32[1,32], index: 6, kind: input, shape index: {}]
  %s7 = inlined_call_operand.hbm [shape: f32[2,256], index: 7, kind: output, shape index: {0}]
  %s8 = inlined_call_operand.hbm [shape: f32[2,32], index: 8, kind: output, shape index: {1}]
  %9 = xla_tuple %s7, %s8
  %s10 = sld [smem:[#allocation0]]
  $region66: #{tpu_custom_call.1} parent=0
    _
  %s12 = ssub.s32 1, %s10
  %s13 = scalar_select 0, %s12, %s10
  $region1: #{tpu_custom_call.1} parent=0
    #allocation2 [shape = 'u8[8192]{0}', space=vmem, size = 0x2000, scoped, tag = 'input window, operand 0, single buffered']
    #allocation3 [shape = 's32[1]{0}', space=sflag, size = 0x4, scoped, tag = 'scoped memory for tpu_custom_call.1']
    #allocation4 [shape = 's32[1]{0}', space=sflag, size = 0x4, scoped, tag = 'scoped memory for tpu_custom_call.1']
    #allocation5 [shape = 'u8[16384]{0}', space=vmem, size = 0x4000, scoped, tag = 'input window, operand 1, single buffered']
    #allocation6 [shape = 's32[1]{0}', space=sflag, size = 0x4, scoped, tag = 'scoped memory for tpu_custom_call.1']
    #allocation7 [shape = 'u8[16384]{0}', space=vmem, size = 0x4000, scoped, tag = 'input window, operand 2, single buffered']
    #allocation8 [shape = 'u8[16384]{0}', space=vmem, size = 0x4000, scoped, tag = 'input window, operand 3, single buffered']
    #allocation9 [shape = 's32[1]{0}', space=sflag, size = 0x4, scoped, tag = 'scoped memory for tpu_custom_call.1']
    #allocation10 [shape = 'u8[16384]{0}', space=vmem, size = 0x4000, scoped, tag = 'input window, operand 4, single buffered']
    #allocation11 [shape = 'u8[2048]{0}', space=vmem, size = 0x800, scoped, tag = 'output window, operand 0, single buffered']
    #allocation12 [shape = 'u8[1024]{0}', space=vmem, size = 0x400, scoped, tag = 'output window, operand 1, single buffered']
    #allocation13 [shape = 's32[1]{0}', space=sflag, size = 0x4, scoped, tag = 'scoped memory for tpu_custom_call.1']
    %14 = vsyncpa [#allocation3], 0
    %15 = vsyncpa [#allocation6], 0
    %16 = vsyncpa [#allocation9], 0
    %17 = vsyncpa [#allocation4], 0
    %18 = vsyncpa [#allocation13], 0
    // Predicated region
    $region2: #{tpu_custom_call.1} parent=1 // pred_check
      _
    $region3: #{tpu_custom_call.1} parent=1 // pred_check_branch
      %20 = sbr.rel (0) target = $region5
    $region4: #{tpu_custom_call.1} parent=1 // pred_region
      %s22 = ssub.s32 256, 256
      %23 = vsyncadd [#allocation3], %s22
      %s24 = sshll.u32 [#allocation2], 4
      %s25 = int_to_ptr.vmem [resolvable:$true] %s24
      %30 = dma.hbm_to_vmem [thread:$0]  %s0, 256, %s25, [#allocation3], 128, 128, 8
    $region5: #{tpu_custom_call.1} parent=1 // pred_fallthru
      _
    // Predicated region
    $region6: #{tpu_custom_call.1} parent=1 // pred_check
      _
    $region7: #{tpu_custom_call.1} parent=1 // pred_check_branch
      %32 = sbr.rel (0) target = $region9
    $region8: #{tpu_custom_call.1} parent=1 // pred_region
      %s34 = ssub.s32 512, 512
      %35 = vsyncadd [#allocation6], %s34
      %s36 = sshll.u32 [#allocation5], 4
      %s37 = int_to_ptr.vmem [resolvable:$true] %s36
      %42 = dma.hbm_to_vmem [thread:$0]  %s1, 512, %s37, [#allocation6], 128, 128, 8
    $region9: #{tpu_custom_call.1} parent=1 // pred_fallthru
      _
    // Predicated region
    $region10: #{tpu_custom_call.1} parent=1 // pred_check
      _
    $region11: #{tpu_custom_call.1} parent=1 // pred_check_branch
      %44 = sbr.rel (0) target = $region13
    $region12: #{tpu_custom_call.1} parent=1 // pred_region
      %s46 = ssub.s32 512, 512
      %47 = vsyncadd [#allocation6], %s46
      %s48 = sshll.u32 [#allocation7], 4
      %s49 = int_to_ptr.vmem [resolvable:$true] %s48
      %54 = dma.hbm_to_vmem [thread:$0]  %s2, 512, %s49, [#allocation6], 128, 128, 8
    $region13: #{tpu_custom_call.1} parent=1 // pred_fallthru
      _
    // Predicated region
    $region14: #{tpu_custom_call.1} parent=1 // pred_check
      _
    $region15: #{tpu_custom_call.1} parent=1 // pred_check_branch
      %56 = sbr.rel (0) target = $region17
    $region16: #{tpu_custom_call.1} parent=1 // pred_region
      %s58 = ssub.s32 512, 512
      %59 = vsyncadd [#allocation9], %s58
      %s60 = sshll.u32 [#allocation8], 4
      %s61 = int_to_ptr.vmem [resolvable:$true] %s60
      %66 = dma.hbm_to_vmem [thread:$0]  %s3, 512, %s61, [#allocation9], 128, 128, 8
    $region17: #{tpu_custom_call.1} parent=1 // pred_fallthru
      _
    // Predicated region
    $region18: #{tpu_custom_call.1} parent=1 // pred_check
      _
    $region19: #{tpu_custom_call.1} parent=1 // pred_check_branch
      %68 = sbr.rel (0) target = $region21
    $region20: #{tpu_custom_call.1} parent=1 // pred_region
      %s70 = ssub.s32 512, 512
      %71 = vsyncadd [#allocation9], %s70
      %s72 = sshll.u32 [#allocation10], 4
      %s73 = int_to_ptr.vmem [resolvable:$true] %s72
      %78 = dma.hbm_to_vmem [thread:$0]  %s4, 512, %s73, [#allocation9], 128, 128, 8
    $region21: #{tpu_custom_call.1} parent=1 // pred_fallthru
      _
    // Predicated region
    $region22: #{tpu_custom_call.1} parent=1 // pred_check
      _
    $region23: #{tpu_custom_call.1} parent=1 // pred_check_branch
      %80 = sbr.rel (0) target = $region25
    $region24: #{tpu_custom_call.1} parent=1 // pred_region
      _
    $region25: #{tpu_custom_call.1} parent=1 // pred_fallthru
      _
    // Predicated region
    $region26: #{tpu_custom_call.1} parent=1 // pred_check
      _
    $region27: #{tpu_custom_call.1} parent=1 // pred_check_branch
      %82 = sbr.rel (0) target = $region29
    $region28: #{tpu_custom_call.1} parent=1 // pred_region
      _
    $region29: #{tpu_custom_call.1} parent=1 // pred_fallthru
      _
    // Predicated region
    $region30: #{tpu_custom_call.1} parent=1 // pred_check
      _
    $region31: #{tpu_custom_call.1} parent=1 // pred_check_branch
      %84 = sbr.rel (0) target = $region33
    $region32: #{tpu_custom_call.1} parent=1 // pred_region
      %85 = dma.done [#allocation3], 256
    $region33: #{tpu_custom_call.1} parent=1 // pred_fallthru
      _
    // Predicated region
    $region34: #{tpu_custom_call.1} parent=1 // pred_check
      _
    $region35: #{tpu_custom_call.1} parent=1 // pred_check_branch
      %87 = sbr.rel (0) target = $region37
    $region36: #{tpu_custom_call.1} parent=1 // pred_region
      %88 = dma.done [#allocation6], 512
    $region37: #{tpu_custom_call.1} parent=1 // pred_fallthru
      _
    // Predicated region
    $region38: #{tpu_custom_call.1} parent=1 // pred_check
      _
    $region39: #{tpu_custom_call.1} parent=1 // pred_check_branch
      %90 = sbr.rel (0) target = $region41
    $region40: #{tpu_custom_call.1} parent=1 // pred_region
      %91 = dma.done [#allocation6], 512
    $region41: #{tpu_custom_call.1} parent=1 // pred_fallthru
      _
    // Predicated region
    $region42: #{tpu_custom_call.1} parent=1 // pred_check
      _
    $region43: #{tpu_custom_call.1} parent=1 // pred_check_branch
      %93 = sbr.rel (0) target = $region45
    $region44: #{tpu_custom_call.1} parent=1 // pred_region
      %94 = dma.done [#allocation9], 512
    $region45: #{tpu_custom_call.1} parent=1 // pred_fallthru
      _
    // Predicated region
    $region46: #{tpu_custom_call.1} parent=1 // pred_check
      _
    $region47: #{tpu_custom_call.1} parent=1 // pred_check_branch
      %96 = sbr.rel (0) target = $region49
    $region48: #{tpu_custom_call.1} parent=1 // pred_region
      %97 = dma.done [#allocation9], 512
    $region49: #{tpu_custom_call.1} parent=1 // pred_fallthru
      _
    %v98 = vld [vmem:[#allocation2] sm:$0xff]
    %v99 = vld [vmem:[#allocation2 + $0x8] sm:$0xff]
    %v100 = vld [vmem:[#allocation5] sm:$0xff]
    %v101 = vld [vmem:[#allocation5 + $0x8] sm:$0xff]
    %v102 = vld [vmem:[#allocation5 + $0x10] sm:$0xff]
    %v103 = vld [vmem:[#allocation5 + $0x18] sm:$0xff]
    %v104 = vld [vmem:[%s5] sm:$0x1]
    %v106 = vlaneseq
    %v107 = vshrl.u32 %v106, 7
    %v108 = vsub.s32 0, %v107
    %v109 = vrot.slane %v104, %v108
    %vm111 = vcmask 261120
    %v113 = vsel %vm111, %v98, 0
    %v116 = vsel %vm111, %v99, 0
    %118 = vmatprep.subr.mxu0 0.0
    %119 = vmatpush1.msra.mxu0 %v100
    %120 = vmatprep.subr.mxu0 0.0
    %121 = vmatpush1.msra.mxu0 %v101
    %122 = vmatprep.subr.mxu0 0.0
    %123 = vmatpush1.msra.mxu0 %v102
    %124 = vmatprep.subr.mxu0 0.0
    %125 = vmatpush1.msra.mxu0 %v103
    %126 = vmatprep.subr.mxu0 0.0
    %127 = vmatpush1.msra.mxu0 0.0
    %128 = vmatprep.subr.mxu0 0.0
    %129 = vmatpush1.msra.mxu0 0.0
    %130 = vmatprep.subr.mxu0 0.0
    %131 = vmatpush1.msra.mxu0 0.0
    %132 = vmatprep.subr.mxu0 0.0
    %133 = vmatpush1.msra.mxu0 0.0
    %134 = vmatprep.subr.mxu0 0.0
    %135 = vmatpush1.msra.mxu0 0.0
    %136 = vmatprep.subr.mxu0 0.0
    %137 = vmatpush1.msra.mxu0 0.0
    %138 = vmatprep.subr.mxu0 0.0
    %139 = vmatpush1.msra.mxu0 0.0
    %140 = vmatprep.subr.mxu0 0.0
    %141 = vmatpush1.msra.mxu0 0.0
    %142 = vmatprep.subr.mxu0 0.0
    %143 = vmatpush1.msra.mxu0 0.0
    %144 = vmatprep.subr.mxu0 0.0
    %145 = vmatpush1.msra.mxu0 0.0
    %146 = vmatprep.subr.mxu0 0.0
    %147 = vmatpush1.msra.mxu0 0.0
    %148 = vmatprep.subr.mxu0 0.0
    %149 = vmatpush1.msra.mxu0 0.0
    %150 = vmatprep.subr.mxu0 0.0
    %151 = vmatpush1.msra.mxu0 0.0
    %152 = vmatprep.subr.mxu0 0.0
    %153 = vmatpush1.msra.mxu0 0.0
    %154 = vmatprep.subr.mxu0 0.0
    %155 = vmatpush1.msra.mxu0 0.0
    %156 = vmatprep.subr.mxu0 0.0
    %157 = vmatpush1.msra.mxu0 0.0
    %158 = vmatprep.subr.mxu0 0.0
    %159 = vmatpush1.msra.mxu0 0.0
    %160 = vmatprep.subr.mxu0 0.0
    %161 = vmatpush1.msra.mxu0 0.0
    %162 = vmatprep.subr.mxu0 0.0
    %163 = vmatpush1.msra.mxu0 0.0
    %164 = vmatprep.subr.mxu0 0.0
    %165 = vmatpush1.msra.mxu0 0.0
    %166 = vmatprep.subr.mxu0 0.0
    %167 = vmatpush1.msra.mxu0 0.0
    %168 = vmatprep.subr.mxu0 0.0
    %169 = vmatpush1.msra.mxu0 0.0
    %170 = vmatprep.subr.mxu0 0.0
    %171 = vmatpush1.msra.mxu0 0.0
    %172 = vmatprep.subr.mxu0 0.0
    %173 = vmatpush1.msra.mxu0 0.0
    %174 = vmatprep.subr.mxu0 0.0
    %175 = vmatpush1.msra.mxu0 0.0
    %176 = vmatprep.subr.mxu0 0.0
    %177 = vmatpush1.msra.mxu0 0.0
    %178 = vmatprep.subr.mxu0 0.0
    %179 = vmatpush1.msra.mxu0 0.0
    %180 = vmatprep.subr.mxu0 0.0
    %181 = vmatpush1.msra.mxu0 0.0
    %182 = vmatprep.mubr.f32.mxu0 0.0
    %183 = vmatmul.mubr.f32.gmra.mrb[0].mxu0 %v113
    %v184 = vpop.f32.mrb[0].mxu0
    %v185 = vadd.f32 %v109, %v184
    %v186 = vpop.f32.mrb[0].mxu0
    %187 = vmatprep.mubr.f32.mxu0 0.0
    %188 = vmatmul.mubr.f32.gmra.mrb[0].mxu0 %v116
    %v189 = vpop.f32.mrb[0].mxu0
    %v190 = vadd.f32 %v109, %v189
    %v191 = vpop.f32.mrb[0].mxu0
    %192 = vdwg.mxu0
    %v193 = vld [vmem:[#allocation7] sm:$0xff]
    %v194 = vld [vmem:[#allocation7 + $0x8] sm:$0xff]
    %v195 = vld [vmem:[#allocation7 + $0x10] sm:$0xff]
    %v196 = vld [vmem:[#allocation7 + $0x18] sm:$0xff]
    %v197 = vld [vmem:[#allocation8] sm:$0xff]
    %v198 = vld [vmem:[#allocation8 + $0x8] sm:$0xff]
    %v199 = vld [vmem:[#allocation8 + $0x10] sm:$0xff]
    %v200 = vld [vmem:[#allocation8 + $0x18] sm:$0xff]
    %v201 = vld [vmem:[#allocation10] sm:$0xff]
    %v202 = vld [vmem:[#allocation10 + $0x8] sm:$0xff]
    %v203 = vld [vmem:[#allocation10 + $0x10] sm:$0xff]
    %v204 = vld [vmem:[#allocation10 + $0x18] sm:$0xff]
    %v205 = vld [vmem:[%s6] sm:$0x1]
    %v207 = vsel %vm111, 0.0, 0
    %209 = vmatprep.subr.mxu0 0.0
    %210 = vmatpush1.msra.mxu0 %v193
    %211 = vmatprep.subr.mxu0 0.0
    %212 = vmatpush1.msra.mxu0 %v194
    %213 = vmatprep.subr.mxu0 0.0
    %214 = vmatpush1.msra.mxu0 %v195
    %215 = vmatprep.subr.mxu0 0.0
    %216 = vmatpush1.msra.mxu0 %v196
    %217 = vmatprep.subr.mxu0 0.0
    %218 = vmatpush1.msra.mxu0 0.0
    %219 = vmatprep.subr.mxu0 0.0
    %220 = vmatpush1.msra.mxu0 0.0
    %221 = vmatprep.subr.mxu0 0.0
    %222 = vmatpush1.msra.mxu0 0.0
    %223 = vmatprep.subr.mxu0 0.0
    %224 = vmatpush1.msra.mxu0 0.0
    %225 = vmatprep.subr.mxu0 0.0
    %226 = vmatpush1.msra.mxu0 0.0
    %227 = vmatprep.subr.mxu0 0.0
    %228 = vmatpush1.msra.mxu0 0.0
    %229 = vmatprep.subr.mxu0 0.0
    %230 = vmatpush1.msra.mxu0 0.0
    %231 = vmatprep.subr.mxu0 0.0
    %232 = vmatpush1.msra.mxu0 0.0
    %233 = vmatprep.subr.mxu0 0.0
    %234 = vmatpush1.msra.mxu0 0.0
    %235 = vmatprep.subr.mxu0 0.0
    %236 = vmatpush1.msra.mxu0 0.0
    %237 = vmatprep.subr.mxu0 0.0
    %238 = vmatpush1.msra.mxu0 0.0
    %239 = vmatprep.subr.mxu0 0.0
    %240 = vmatpush1.msra.mxu0 0.0
    %241 = vmatprep.subr.mxu0 0.0
    %242 = vmatpush1.msra.mxu0 0.0
    %243 = vmatprep.subr.mxu0 0.0
    %244 = vmatpush1.msra.mxu0 0.0
    %245 = vmatprep.subr.mxu0 0.0
    %246 = vmatpush1.msra.mxu0 0.0
    %247 = vmatprep.subr.mxu0 0.0
    %248 = vmatpush1.msra.mxu0 0.0
    %249 = vmatprep.subr.mxu0 0.0
    %250 = vmatpush1.msra.mxu0 0.0
    %251 = vmatprep.subr.mxu0 0.0
    %252 = vmatpush1.msra.mxu0 0.0
    %253 = vmatprep.subr.mxu0 0.0
    %254 = vmatpush1.msra.mxu0 0.0
    %255 = vmatprep.subr.mxu0 0.0
    %256 = vmatpush1.msra.mxu0 0.0
    %257 = vmatprep.subr.mxu0 0.0
    %258 = vmatpush1.msra.mxu0 0.0
    %259 = vmatprep.subr.mxu0 0.0
    %260 = vmatpush1.msra.mxu0 0.0
    %261 = vmatprep.subr.mxu0 0.0
    %262 = vmatpush1.msra.mxu0 0.0
    %263 = vmatprep.subr.mxu0 0.0
    %264 = vmatpush1.msra.mxu0 0.0
    %265 = vmatprep.subr.mxu0 0.0
    %266 = vmatpush1.msra.mxu0 0.0
    %267 = vmatprep.subr.mxu0 0.0
    %268 = vmatpush1.msra.mxu0 0.0
    %269 = vmatprep.subr.mxu0 0.0
    %270 = vmatpush1.msra.mxu0 0.0
    %271 = vmatprep.subr.mxu0 0.0
    %272 = vmatpush1.msra.mxu0 0.0
    %273 = vmatprep.mubr.f32.mxu0 0.0
    %274 = vmatmul.mubr.f32.gmra.mrb[0].mxu0 %v207
    %v275 = vpop.f32.mrb[0].mxu0
    %v276 = vadd.f32 0.0, %v275
    %v277 = vpop.f32.mrb[0].mxu0
    %278 = vdwg.mxu0
    %279 = vmatprep.subr.mxu0 0.0
    %280 = vmatpush1.msra.mxu0 %v197
    %281 = vmatprep.subr.mxu0 0.0
    %282 = vmatpush1.msra.mxu0 %v198
    %283 = vmatprep.subr.mxu0 0.0
    %284 = vmatpush1.msra.mxu0 %v199
    %285 = vmatprep.subr.mxu0 0.0
    %286 = vmatpush1.msra.mxu0 %v200
    %287 = vmatprep.subr.mxu0 0.0
    %288 = vmatpush1.msra.mxu0 0.0
    %289 = vmatprep.subr.mxu0 0.0
    %290 = vmatpush1.msra.mxu0 0.0
    %291 = vmatprep.subr.mxu0 0.0
    %292 = vmatpush1.msra.mxu0 0.0
    %293 = vmatprep.subr.mxu0 0.0
    %294 = vmatpush1.msra.mxu0 0.0
    %295 = vmatprep.subr.mxu0 0.0
    %296 = vmatpush1.msra.mxu0 0.0
    %297 = vmatprep.subr.mxu0 0.0
    %298 = vmatpush1.msra.mxu0 0.0
    %299 = vmatprep.subr.mxu0 0.0
    %300 = vmatpush1.msra.mxu0 0.0
    %301 = vmatprep.subr.mxu0 0.0
    %302 = vmatpush1.msra.mxu0 0.0
    %303 = vmatprep.subr.mxu0 0.0
    %304 = vmatpush1.msra.mxu0 0.0
    %305 = vmatprep.subr.mxu0 0.0
    %306 = vmatpush1.msra.mxu0 0.0
    %307 = vmatprep.subr.mxu0 0.0
    %308 = vmatpush1.msra.mxu0 0.0
    %309 = vmatprep.subr.mxu0 0.0
    %310 = vmatpush1.msra.mxu0 0.0
    %311 = vmatprep.subr.mxu0 0.0
    %312 = vmatpush1.msra.mxu0 0.0
    %313 = vmatprep.subr.mxu0 0.0
    %314 = vmatpush1.msra.mxu0 0.0
    %315 = vmatprep.subr.mxu0 0.0
    %316 = vmatpush1.msra.mxu0 0.0
    %317 = vmatprep.subr.mxu0 0.0
    %318 = vmatpush1.msra.mxu0 0.0
    %319 = vmatprep.subr.mxu0 0.0
    %320 = vmatpush1.msra.mxu0 0.0
    %321 = vmatprep.subr.mxu0 0.0
    %322 = vmatpush1.msra.mxu0 0.0
    %323 = vmatprep.subr.mxu0 0.0
    %324 = vmatpush1.msra.mxu0 0.0
    %325 = vmatprep.subr.mxu0 0.0
    %326 = vmatpush1.msra.mxu0 0.0
    %327 = vmatprep.subr.mxu0 0.0
    %328 = vmatpush1.msra.mxu0 0.0
    %329 = vmatprep.subr.mxu0 0.0
    %330 = vmatpush1.msra.mxu0 0.0
    %331 = vmatprep.subr.mxu0 0.0
    %332 = vmatpush1.msra.mxu0 0.0
    %333 = vmatprep.subr.mxu0 0.0
    %334 = vmatpush1.msra.mxu0 0.0
    %335 = vmatprep.subr.mxu0 0.0
    %336 = vmatpush1.msra.mxu0 0.0
    %337 = vmatprep.subr.mxu0 0.0
    %338 = vmatpush1.msra.mxu0 0.0
    %339 = vmatprep.subr.mxu0 0.0
    %340 = vmatpush1.msra.mxu0 0.0
    %341 = vmatprep.subr.mxu0 0.0
    %342 = vmatpush1.msra.mxu0 0.0
    %343 = vmatprep.mubr.f32.mxu0 0.0
    %344 = vmatmul.mubr.f32.gmra.mrb[0].mxu0 %v207
    %v345 = vpop.f32.mrb[0].mxu0
    %v346 = vadd.f32 0.0, %v345
    %v347 = vpop.f32.mrb[0].mxu0
    %348 = vdwg.mxu0
    %v349 = vadd.f32 %v185, %v276
    %v350 = vxor.u32 %v349, 2147483648
    %v351 = vmul.f32 %v350, 1.442695
    %v352 = vpow.pop %v351
    %v353 = vadd.f32 %v352, 1.0
    %v354 = vrcp.pop %v353
    %v355 = vmul.f32 1.0, %v354
    %357 = vrot.lane.b32.xlu0 %v346, 32
    %v358 = vpop.permute.xlu0 %357
    %v360 = vadd.f32 %v185, %v358
    %v361 = vxor.u32 %v360, 2147483648
    %v362 = vmul.f32 %v361, 1.442695
    %v363 = vpow.pop %v362
    %v364 = vadd.f32 %v363, 1.0
    %v365 = vrcp.pop %v364
    %v366 = vmul.f32 1.0, %v365
    %v368 = vlaneseq
    %v369 = vshrl.u32 %v368, 7
    %v370 = vsub.s32 0, %v369
    %v371 = vrot.slane %v205, %v370
    %373 = vmatprep.subr.mxu0 0.0
    %374 = vmatpush1.msra.mxu0 %v201
    %375 = vmatprep.subr.mxu0 0.0
    %376 = vmatpush1.msra.mxu0 %v202
    %377 = vmatprep.subr.mxu0 0.0
    %378 = vmatpush1.msra.mxu0 %v203
    %379 = vmatprep.subr.mxu0 0.0
    %380 = vmatpush1.msra.mxu0 %v204
    %381 = vmatprep.subr.mxu0 0.0
    %382 = vmatpush1.msra.mxu0 0.0
    %383 = vmatprep.subr.mxu0 0.0
    %384 = vmatpush1.msra.mxu0 0.0
    %385 = vmatprep.subr.mxu0 0.0
    %386 = vmatpush1.msra.mxu0 0.0
    %387 = vmatprep.subr.mxu0 0.0
    %388 = vmatpush1.msra.mxu0 0.0
    %389 = vmatprep.subr.mxu0 0.0
    %390 = vmatpush1.msra.mxu0 0.0
    %391 = vmatprep.subr.mxu0 0.0
    %392 = vmatpush1.msra.mxu0 0.0
    %393 = vmatprep.subr.mxu0 0.0
    %394 = vmatpush1.msra.mxu0 0.0
    %395 = vmatprep.subr.mxu0 0.0
    %396 = vmatpush1.msra.mxu0 0.0
    %397 = vmatprep.subr.mxu0 0.0
    %398 = vmatpush1.msra.mxu0 0.0
    %399 = vmatprep.subr.mxu0 0.0
    %400 = vmatpush1.msra.mxu0 0.0
    %401 = vmatprep.subr.mxu0 0.0
    %402 = vmatpush1.msra.mxu0 0.0
    %403 = vmatprep.subr.mxu0 0.0
    %404 = vmatpush1.msra.mxu0 0.0
    %405 = vmatprep.subr.mxu0 0.0
    %406 = vmatpush1.msra.mxu0 0.0
    %407 = vmatprep.subr.mxu0 0.0
    %408 = vmatpush1.msra.mxu0 0.0
    %409 = vmatprep.subr.mxu0 0.0
    %410 = vmatpush1.msra.mxu0 0.0
    %411 = vmatprep.subr.mxu0 0.0
    %412 = vmatpush1.msra.mxu0 0.0
    %413 = vmatprep.subr.mxu0 0.0
    %414 = vmatpush1.msra.mxu0 0.0
    %415 = vmatprep.subr.mxu0 0.0
    %416 = vmatpush1.msra.mxu0 0.0
    %417 = vmatprep.subr.mxu0 0.0
    %418 = vmatpush1.msra.mxu0 0.0
    %419 = vmatprep.subr.mxu0 0.0
    %420 = vmatpush1.msra.mxu0 0.0
    %421 = vmatprep.subr.mxu0 0.0
    %422 = vmatpush1.msra.mxu0 0.0
    %423 = vmatprep.subr.mxu0 0.0
    %424 = vmatpush1.msra.mxu0 0.0
    %425 = vmatprep.subr.mxu0 0.0
    %426 = vmatpush1.msra.mxu0 0.0
    %427 = vmatprep.subr.mxu0 0.0
    %428 = vmatpush1.msra.mxu0 0.0
    %429 = vmatprep.subr.mxu0 0.0
    %430 = vmatpush1.msra.mxu0 0.0
    %431 = vmatprep.subr.mxu0 0.0
    %432 = vmatpush1.msra.mxu0 0.0
    %433 = vmatprep.subr.mxu0 0.0
    %434 = vmatpush1.msra.mxu0 0.0
    %435 = vmatprep.subr.mxu0 0.0
    %436 = vmatpush1.msra.mxu0 0.0
    %437 = vmatprep.mubr.f32.mxu0 0.0
    %438 = vmatmul.mubr.f32.gmra.mrb[0].mxu0 %v207
    %v439 = vpop.f32.mrb[0].mxu0
    %v440 = vadd.f32 %v371, %v439
    %v441 = vpop.f32.mrb[0].mxu0
    %442 = vdwg.mxu0
    %v443 = vmul.f32 %v355, %v440
    %445 = vrot.lane.b32.xlu0 %v443, 64
    %v446 = vpop.permute.xlu0 %445
    %v448 = vadd.f32 %v185, %v446
    %v449 = vtanh.pop %v448
    %v450 = vsub.f32 0.0, %v449
    %452 = vrot.lane.b32.xlu0 %v450, 96
    %v453 = vpop.permute.xlu0 %452
    %v455 = vmul.f32 %v366, %v453
    %457 = vrot.lane.b32.xlu0 %v455, 32
    %v458 = vpop.permute.xlu0 %457
    %v460 = vadd.f32 %v449, %v458
    %v463 = vunpack.c.l.s4 1983009808
    %v464 = vunpack.c.0.s8 %v463
    %v465 = vlaneseq
    %v466 = vshrl.u32 %v465, 7
    %v467 = vsub.s32 %v464, %v466
    %v468 = vrot.slane %v460, %v467
    %469 = vrot.lane.b32.xlu0 %v468, 64
    %v470 = vpop.permute.xlu0 %469
    %vm472 = vcmask 254976
    %473 = vst.msk [vmem:[#allocation11] sm:$0x3] %vm472, %v470
    %474 = vrot.lane.b32.xlu0 %v460, 64
    %v475 = vpop.permute.xlu0 %474
    %v476 = vsel %vm111, %v475, 0
    %478 = vmatprep.subr.mxu0 0.0
    %479 = vmatpush1.msra.mxu0 %v193
    %480 = vmatprep.subr.mxu0 0.0
    %481 = vmatpush1.msra.mxu0 %v194
    %482 = vmatprep.subr.mxu0 0.0
    %483 = vmatpush1.msra.mxu0 %v195
    %484 = vmatprep.subr.mxu0 0.0
    %485 = vmatpush1.msra.mxu0 %v196
    %486 = vmatprep.subr.mxu0 0.0
    %487 = vmatpush1.msra.mxu0 0.0
    %488 = vmatprep.subr.mxu0 0.0
    %489 = vmatpush1.msra.mxu0 0.0
    %490 = vmatprep.subr.mxu0 0.0
    %491 = vmatpush1.msra.mxu0 0.0
    %492 = vmatprep.subr.mxu0 0.0
    %493 = vmatpush1.msra.mxu0 0.0
    %494 = vmatprep.subr.mxu0 0.0
    %495 = vmatpush1.msra.mxu0 0.0
    %496 = vmatprep.subr.mxu0 0.0
    %497 = vmatpush1.msra.mxu0 0.0
    %498 = vmatprep.subr.mxu0 0.0
    %499 = vmatpush1.msra.mxu0 0.0
    %500 = vmatprep.subr.mxu0 0.0
    %501 = vmatpush1.msra.mxu0 0.0
    %502 = vmatprep.subr.mxu0 0.0
    %503 = vmatpush1.msra.mxu0 0.0
    %504 = vmatprep.subr.mxu0 0.0
    %505 = vmatpush1.msra.mxu0 0.0
    %506 = vmatprep.subr.mxu0 0.0
    %507 = vmatpush1.msra.mxu0 0.0
    %508 = vmatprep.subr.mxu0 0.0
    %509 = vmatpush1.msra.mxu0 0.0
    %510 = vmatprep.subr.mxu0 0.0
    %511 = vmatpush1.msra.mxu0 0.0
    %512 = vmatprep.subr.mxu0 0.0
    %513 = vmatpush1.msra.mxu0 0.0
    %514 = vmatprep.subr.mxu0 0.0
    %515 = vmatpush1.msra.mxu0 0.0
    %516 = vmatprep.subr.mxu0 0.0
    %517 = vmatpush1.msra.mxu0 0.0
    %518 = vmatprep.subr.mxu0 0.0
    %519 = vmatpush1.msra.mxu0 0.0
    %520 = vmatprep.subr.mxu0 0.0
    %521 = vmatpush1.msra.mxu0 0.0
    %522 = vmatprep.subr.mxu0 0.0
    %523 = vmatpush1.msra.mxu0 0.0
    %524 = vmatprep.subr.mxu0 0.0
    %525 = vmatpush1.msra.mxu0 0.0
    %526 = vmatprep.subr.mxu0 0.0
    %527 = vmatpush1.msra.mxu0 0.0
    %528 = vmatprep.subr.mxu0 0.0
    %529 = vmatpush1.msra.mxu0 0.0
    %530 = vmatprep.subr.mxu0 0.0
    %531 = vmatpush1.msra.mxu0 0.0
    %532 = vmatprep.subr.mxu0 0.0
    %533 = vmatpush1.msra.mxu0 0.0
    %534 = vmatprep.subr.mxu0 0.0
    %535 = vmatpush1.msra.mxu0 0.0
    %536 = vmatprep.subr.mxu0 0.0
    %537 = vmatpush1.msra.mxu0 0.0
    %538 = vmatprep.subr.mxu0 0.0
    %539 = vmatpush1.msra.mxu0 0.0
    %540 = vmatprep.subr.mxu0 0.0
    %541 = vmatpush1.msra.mxu0 0.0
    %542 = vmatprep.mubr.f32.mxu0 0.0
    %543 = vmatmul.mubr.f32.gmra.mrb[0].mxu0 %v476
    %v544 = vpop.f32.mrb[0].mxu0
    %v545 = vadd.f32 0.0, %v544
    %v546 = vpop.f32.mrb[0].mxu0
    %547 = vdwg.mxu0
    %548 = vmatprep.subr.mxu0 0.0
    %549 = vmatpush1.msra.mxu0 %v197
    %550 = vmatprep.subr.mxu0 0.0
    %551 = vmatpush1.msra.mxu0 %v198
    %552 = vmatprep.subr.mxu0 0.0
    %553 = vmatpush1.msra.mxu0 %v199
    %554 = vmatprep.subr.mxu0 0.0
    %555 = vmatpush1.msra.mxu0 %v200
    %556 = vmatprep.subr.mxu0 0.0
    %557 = vmatpush1.msra.mxu0 0.0
    %558 = vmatprep.subr.mxu0 0.0
    %559 = vmatpush1.msra.mxu0 0.0
    %560 = vmatprep.subr.mxu0 0.0
    %561 = vmatpush1.msra.mxu0 0.0
    %562 = vmatprep.subr.mxu0 0.0
    %563 = vmatpush1.msra.mxu0 0.0
    %564 = vmatprep.subr.mxu0 0.0
    %565 = vmatpush1.msra.mxu0 0.0
    %566 = vmatprep.subr.mxu0 0.0
    %567 = vmatpush1.msra.mxu0 0.0
    %568 = vmatprep.subr.mxu0 0.0
    %569 = vmatpush1.msra.mxu0 0.0
    %570 = vmatprep.subr.mxu0 0.0
    %571 = vmatpush1.msra.mxu0 0.0
    %572 = vmatprep.subr.mxu0 0.0
    %573 = vmatpush1.msra.mxu0 0.0
    %574 = vmatprep.subr.mxu0 0.0
    %575 = vmatpush1.msra.mxu0 0.0
    %576 = vmatprep.subr.mxu0 0.0
    %577 = vmatpush1.msra.mxu0 0.0
    %578 = vmatprep.subr.mxu0 0.0
    %579 = vmatpush1.msra.mxu0 0.0
    %580 = vmatprep.subr.mxu0 0.0
    %581 = vmatpush1.msra.mxu0 0.0
    %582 = vmatprep.subr.mxu0 0.0
    %583 = vmatpush1.msra.mxu0 0.0
    %584 = vmatprep.subr.mxu0 0.0
    %585 = vmatpush1.msra.mxu0 0.0
    %586 = vmatprep.subr.mxu0 0.0
    %587 = vmatpush1.msra.mxu0 0.0
    %588 = vmatprep.subr.mxu0 0.0
    %589 = vmatpush1.msra.mxu0 0.0
    %590 = vmatprep.subr.mxu0 0.0
    %591 = vmatpush1.msra.mxu0 0.0
    %592 = vmatprep.subr.mxu0 0.0
    %593 = vmatpush1.msra.mxu0 0.0
    %594 = vmatprep.subr.mxu0 0.0
    %595 = vmatpush1.msra.mxu0 0.0
    %596 = vmatprep.subr.mxu0 0.0
    %597 = vmatpush1.msra.mxu0 0.0
    %598 = vmatprep.subr.mxu0 0.0
    %599 = vmatpush1.msra.mxu0 0.0
    %600 = vmatprep.subr.mxu0 0.0
    %601 = vmatpush1.msra.mxu0 0.0
    %602 = vmatprep.subr.mxu0 0.0
    %603 = vmatpush1.msra.mxu0 0.0
    %604 = vmatprep.subr.mxu0 0.0
    %605 = vmatpush1.msra.mxu0 0.0
    %606 = vmatprep.subr.mxu0 0.0
    %607 = vmatpush1.msra.mxu0 0.0
    %608 = vmatprep.subr.mxu0 0.0
    %609 = vmatpush1.msra.mxu0 0.0
    %610 = vmatprep.subr.mxu0 0.0
    %611 = vmatpush1.msra.mxu0 0.0
    %612 = vmatprep.mubr.f32.mxu0 0.0
    %613 = vmatmul.mubr.f32.gmra.mrb[0].mxu0 %v476
    %v614 = vpop.f32.mrb[0].mxu0
    %v615 = vadd.f32 0.0, %v614
    %v616 = vpop.f32.mrb[0].mxu0
    %617 = vdwg.mxu0
    %v619 = vrot.slane %v545, 6
    %v621 = vadd.f32 %v185, %v619
    %v622 = vxor.u32 %v621, 2147483648
    %v623 = vmul.f32 %v622, 1.442695
    %v624 = vpow.pop %v623
    %v625 = vadd.f32 %v624, 1.0
    %v626 = vrcp.pop %v625
    %v627 = vmul.f32 1.0, %v626
    %v629 = vrot.slane %v615, 6
    %630 = vrot.lane.b32.xlu0 %v629, 32
    %v631 = vpop.permute.xlu0 %630
    %v633 = vadd.f32 %v185, %v631
    %v634 = vxor.u32 %v633, 2147483648
    %v635 = vmul.f32 %v634, 1.442695
    %v636 = vpow.pop %v635
    %v637 = vadd.f32 %v636, 1.0
    %v638 = vrcp.pop %v637
    %v639 = vmul.f32 1.0, %v638
    %640 = vmatprep.subr.mxu0 0.0
    %641 = vmatpush1.msra.mxu0 %v201
    %642 = vmatprep.subr.mxu0 0.0
    %643 = vmatpush1.msra.mxu0 %v202
    %644 = vmatprep.subr.mxu0 0.0
    %645 = vmatpush1.msra.mxu0 %v203
    %646 = vmatprep.subr.mxu0 0.0
    %647 = vmatpush1.msra.mxu0 %v204
    %648 = vmatprep.subr.mxu0 0.0
    %649 = vmatpush1.msra.mxu0 0.0
    %650 = vmatprep.subr.mxu0 0.0
    %651 = vmatpush1.msra.mxu0 0.0
    %652 = vmatprep.subr.mxu0 0.0
    %653 = vmatpush1.msra.mxu0 0.0
    %654 = vmatprep.subr.mxu0 0.0
    %655 = vmatpush1.msra.mxu0 0.0
    %656 = vmatprep.subr.mxu0 0.0
    %657 = vmatpush1.msra.mxu0 0.0
    %658 = vmatprep.subr.mxu0 0.0
    %659 = vmatpush1.msra.mxu0 0.0
    %660 = vmatprep.subr.mxu0 0.0
    %661 = vmatpush1.msra.mxu0 0.0
    %662 = vmatprep.subr.mxu0 0.0
    %663 = vmatpush1.msra.mxu0 0.0
    %664 = vmatprep.subr.mxu0 0.0
    %665 = vmatpush1.msra.mxu0 0.0
    %666 = vmatprep.subr.mxu0 0.0
    %667 = vmatpush1.msra.mxu0 0.0
    %668 = vmatprep.subr.mxu0 0.0
    %669 = vmatpush1.msra.mxu0 0.0
    %670 = vmatprep.subr.mxu0 0.0
    %671 = vmatpush1.msra.mxu0 0.0
    %672 = vmatprep.subr.mxu0 0.0
    %673 = vmatpush1.msra.mxu0 0.0
    %674 = vmatprep.subr.mxu0 0.0
    %675 = vmatpush1.msra.mxu0 0.0
    %676 = vmatprep.subr.mxu0 0.0
    %677 = vmatpush1.msra.mxu0 0.0
    %678 = vmatprep.subr.mxu0 0.0
    %679 = vmatpush1.msra.mxu0 0.0
    %680 = vmatprep.subr.mxu0 0.0
    %681 = vmatpush1.msra.mxu0 0.0
    %682 = vmatprep.subr.mxu0 0.0
    %683 = vmatpush1.msra.mxu0 0.0
    %684 = vmatprep.subr.mxu0 0.0
    %685 = vmatpush1.msra.mxu0 0.0
    %686 = vmatprep.subr.mxu0 0.0
    %687 = vmatpush1.msra.mxu0 0.0
    %688 = vmatprep.subr.mxu0 0.0
    %689 = vmatpush1.msra.mxu0 0.0
    %690 = vmatprep.subr.mxu0 0.0
    %691 = vmatpush1.msra.mxu0 0.0
    %692 = vmatprep.subr.mxu0 0.0
    %693 = vmatpush1.msra.mxu0 0.0
    %694 = vmatprep.subr.mxu0 0.0
    %695 = vmatpush1.msra.mxu0 0.0
    %696 = vmatprep.subr.mxu0 0.0
    %697 = vmatpush1.msra.mxu0 0.0
    %698 = vmatprep.subr.mxu0 0.0
    %699 = vmatpush1.msra.mxu0 0.0
    %700 = vmatprep.subr.mxu0 0.0
    %701 = vmatpush1.msra.mxu0 0.0
    %702 = vmatprep.subr.mxu0 0.0
    %703 = vmatpush1.msra.mxu0 0.0
    %704 = vmatprep.mubr.f32.mxu0 0.0
    %705 = vmatmul.mubr.f32.gmra.mrb[0].mxu0 %v476
    %v706 = vpop.f32.mrb[0].mxu0
    %v707 = vadd.f32 %v371, %v706
    %v708 = vpop.f32.mrb[0].mxu0
    %709 = vdwg.mxu0
    %v711 = vrot.slane %v707, 6
    %v713 = vmul.f32 %v627, %v711
    %715 = vrot.lane.b32.xlu0 %v713, 64
    %v716 = vpop.permute.xlu0 %715
    %v718 = vadd.f32 %v185, %v716
    %v719 = vtanh.pop %v718
    %v721 = vrot.slane %v719, 2
    %v723 = vsub.f32 %v460, %v721
    %v725 = vrot.slane %v723, 6
    %726 = vrot.lane.b32.xlu0 %v725, 96
    %v727 = vpop.permute.xlu0 %726
    %v729 = vmul.f32 %v639, %v727
    %731 = vrot.lane.b32.xlu0 %v729, 32
    %v732 = vpop.permute.xlu0 %731
    %v734 = vadd.f32 %v719, %v732
    %v737 = vunpack.c.l.s4 1983009808
    %v738 = vunpack.c.0.s8 %v737
    %v739 = vlaneseq
    %v740 = vshrl.u32 %v739, 7
    %v741 = vsub.s32 %v738, %v740
    %v742 = vrot.slane %v734, %v741
    %v743 = vcombine.high %v742, %v742
    %744 = vrot.lane.b32.xlu0 %v743, 96
    %v745 = vpop.permute.xlu0 %744
    %vm747 = vcmask 517376
    %748 = vst.msk [vmem:[#allocation11] sm:$0x3] %vm747, %v745
    %v749 = vrot.slane %v734, 2
    %750 = vrot.lane.b32.xlu0 %v749, 64
    %v751 = vpop.permute.xlu0 %750
    %v752 = vsel %vm111, %v751, 0
    %754 = vmatprep.subr.mxu0 0.0
    %755 = vmatpush1.msra.mxu0 %v193
    %756 = vmatprep.subr.mxu0 0.0
    %757 = vmatpush1.msra.mxu0 %v194
    %758 = vmatprep.subr.mxu0 0.0
    %759 = vmatpush1.msra.mxu0 %v195
    %760 = vmatprep.subr.mxu0 0.0
    %761 = vmatpush1.msra.mxu0 %v196
    %762 = vmatprep.subr.mxu0 0.0
    %763 = vmatpush1.msra.mxu0 0.0
    %764 = vmatprep.subr.mxu0 0.0
    %765 = vmatpush1.msra.mxu0 0.0
    %766 = vmatprep.subr.mxu0 0.0
    %767 = vmatpush1.msra.mxu0 0.0
    %768 = vmatprep.subr.mxu0 0.0
    %769 = vmatpush1.msra.mxu0 0.0
    %770 = vmatprep.subr.mxu0 0.0
    %771 = vmatpush1.msra.mxu0 0.0
    %772 = vmatprep.subr.mxu0 0.0
    %773 = vmatpush1.msra.mxu0 0.0
    %774 = vmatprep.subr.mxu0 0.0
    %775 = vmatpush1.msra.mxu0 0.0
    %776 = vmatprep.subr.mxu0 0.0
    %777 = vmatpush1.msra.mxu0 0.0
    %778 = vmatprep.subr.mxu0 0.0
    %779 = vmatpush1.msra.mxu0 0.0
    %780 = vmatprep.subr.mxu0 0.0
    %781 = vmatpush1.msra.mxu0 0.0
    %782 = vmatprep.subr.mxu0 0.0
    %783 = vmatpush1.msra.mxu0 0.0
    %784 = vmatprep.subr.mxu0 0.0
    %785 = vmatpush1.msra.mxu0 0.0
    %786 = vmatprep.subr.mxu0 0.0
    %787 = vmatpush1.msra.mxu0 0.0
    %788 = vmatprep.subr.mxu0 0.0
    %789 = vmatpush1.msra.mxu0 0.0
    %790 = vmatprep.subr.mxu0 0.0
    %791 = vmatpush1.msra.mxu0 0.0
    %792 = vmatprep.subr.mxu0 0.0
    %793 = vmatpush1.msra.mxu0 0.0
    %794 = vmatprep.subr.mxu0 0.0
    %795 = vmatpush1.msra.mxu0 0.0
    %796 = vmatprep.subr.mxu0 0.0
    %797 = vmatpush1.msra.mxu0 0.0
    %798 = vmatprep.subr.mxu0 0.0
    %799 = vmatpush1.msra.mxu0 0.0
    %800 = vmatprep.subr.mxu0 0.0
    %801 = vmatpush1.msra.mxu0 0.0
    %802 = vmatprep.subr.mxu0 0.0
    %803 = vmatpush1.msra.mxu0 0.0
    %804 = vmatprep.subr.mxu0 0.0
    %805 = vmatpush1.msra.mxu0 0.0
    %806 = vmatprep.subr.mxu0 0.0
    %807 = vmatpush1.msra.mxu0 0.0
    %808 = vmatprep.subr.mxu0 0.0
    %809 = vmatpush1.msra.mxu0 0.0
    %810 = vmatprep.subr.mxu0 0.0
    %811 = vmatpush1.msra.mxu0 0.0
    %812 = vmatprep.subr.mxu0 0.0
    %813 = vmatpush1.msra.mxu0 0.0
    %814 = vmatprep.subr.mxu0 0.0
    %815 = vmatpush1.msra.mxu0 0.0
    %816 = vmatprep.subr.mxu0 0.0
    %817 = vmatpush1.msra.mxu0 0.0
    %818 = vmatprep.mubr.f32.mxu0 0.0
    %819 = vmatmul.mubr.f32.gmra.mrb[0].mxu0 %v752
    %v820 = vpop.f32.mrb[0].mxu0
    %v821 = vadd.f32 0.0, %v820
    %v822 = vpop.f32.mrb[0].mxu0
    %823 = vdwg.mxu0
    %824 = vmatprep.subr.mxu0 0.0
    %825 = vmatpush1.msra.mxu0 %v197
    %826 = vmatprep.subr.mxu0 0.0
    %827 = vmatpush1.msra.mxu0 %v198
    %828 = vmatprep.subr.mxu0 0.0
    %829 = vmatpush1.msra.mxu0 %v199
    %830 = vmatprep.subr.mxu0 0.0
    %831 = vmatpush1.msra.mxu0 %v200
    %832 = vmatprep.subr.mxu0 0.0
    %833 = vmatpush1.msra.mxu0 0.0
    %834 = vmatprep.subr.mxu0 0.0
    %835 = vmatpush1.msra.mxu0 0.0
    %836 = vmatprep.subr.mxu0 0.0
    %837 = vmatpush1.msra.mxu0 0.0
    %838 = vmatprep.subr.mxu0 0.0
    %839 = vmatpush1.msra.mxu0 0.0
    %840 = vmatprep.subr.mxu0 0.0
    %841 = vmatpush1.msra.mxu0 0.0
    %842 = vmatprep.subr.mxu0 0.0
    %843 = vmatpush1.msra.mxu0 0.0
    %844 = vmatprep.subr.mxu0 0.0
    %845 = vmatpush1.msra.mxu0 0.0
    %846 = vmatprep.subr.mxu0 0.0
    %847 = vmatpush1.msra.mxu0 0.0
    %848 = vmatprep.subr.mxu0 0.0
    %849 = vmatpush1.msra.mxu0 0.0
    %850 = vmatprep.subr.mxu0 0.0
    %851 = vmatpush1.msra.mxu0 0.0
    %852 = vmatprep.subr.mxu0 0.0
    %853 = vmatpush1.msra.mxu0 0.0
    %854 = vmatprep.subr.mxu0 0.0
    %855 = vmatpush1.msra.mxu0 0.0
    %856 = vmatprep.subr.mxu0 0.0
    %857 = vmatpush1.msra.mxu0 0.0
    %858 = vmatprep.subr.mxu0 0.0
    %859 = vmatpush1.msra.mxu0 0.0
    %860 = vmatprep.subr.mxu0 0.0
    %861 = vmatpush1.msra.mxu0 0.0
    %862 = vmatprep.subr.mxu0 0.0
    %863 = vmatpush1.msra.mxu0 0.0
    %864 = vmatprep.subr.mxu0 0.0
    %865 = vmatpush1.msra.mxu0 0.0
    %866 = vmatprep.subr.mxu0 0.0
    %867 = vmatpush1.msra.mxu0 0.0
    %868 = vmatprep.subr.mxu0 0.0
    %869 = vmatpush1.msra.mxu0 0.0
    %870 = vmatprep.subr.mxu0 0.0
    %871 = vmatpush1.msra.mxu0 0.0
    %872 = vmatprep.subr.mxu0 0.0
    %873 = vmatpush1.msra.mxu0 0.0
    %874 = vmatprep.subr.mxu0 0.0
    %875 = vmatpush1.msra.mxu0 0.0
    %876 = vmatprep.subr.mxu0 0.0
    %877 = vmatpush1.msra.mxu0 0.0
    %878 = vmatprep.subr.mxu0 0.0
    %879 = vmatpush1.msra.mxu0 0.0
    %880 = vmatprep.subr.mxu0 0.0
    %881 = vmatpush1.msra.mxu0 0.0
    %882 = vmatprep.subr.mxu0 0.0
    %883 = vmatpush1.msra.mxu0 0.0
    %884 = vmatprep.subr.mxu0 0.0
    %885 = vmatpush1.msra.mxu0 0.0
    %886 = vmatprep.subr.mxu0 0.0
    %887 = vmatpush1.msra.mxu0 0.0
    %888 = vmatprep.mubr.f32.mxu0 0.0
    %889 = vmatmul.mubr.f32.gmra.mrb[0].mxu0 %v752
    %v890 = vpop.f32.mrb[0].mxu0
    %v891 = vadd.f32 0.0, %v890
    %v892 = vpop.f32.mrb[0].mxu0
    %893 = vdwg.mxu0
    %v895 = vrot.slane %v821, 4
    %v897 = vadd.f32 %v185, %v895
    %v898 = vxor.u32 %v897, 2147483648
    %v899 = vmul.f32 %v898, 1.442695
    %v900 = vpow.pop %v899
    %v901 = vadd.f32 %v900, 1.0
    %v902 = vrcp.pop %v901
    %v903 = vmul.f32 1.0, %v902
    %v905 = vrot.slane %v891, 4
    %906 = vrot.lane.b32.xlu0 %v905, 32
    %v907 = vpop.permute.xlu0 %906
    %v909 = vadd.f32 %v185, %v907
    %v910 = vxor.u32 %v909, 2147483648
    %v911 = vmul.f32 %v910, 1.442695
    %v912 = vpow.pop %v911
    %v913 = vadd.f32 %v912, 1.0
    %v914 = vrcp.pop %v913
    %v915 = vmul.f32 1.0, %v914
    %916 = vmatprep.subr.mxu0 0.0
    %917 = vmatpush1.msra.mxu0 %v201
    %918 = vmatprep.subr.mxu0 0.0
    %919 = vmatpush1.msra.mxu0 %v202
    %920 = vmatprep.subr.mxu0 0.0
    %921 = vmatpush1.msra.mxu0 %v203
    %922 = vmatprep.subr.mxu0 0.0
    %923 = vmatpush1.msra.mxu0 %v204
    %924 = vmatprep.subr.mxu0 0.0
    %925 = vmatpush1.msra.mxu0 0.0
    %926 = vmatprep.subr.mxu0 0.0
    %927 = vmatpush1.msra.mxu0 0.0
    %928 = vmatprep.subr.mxu0 0.0
    %929 = vmatpush1.msra.mxu0 0.0
    %930 = vmatprep.subr.mxu0 0.0
    %931 = vmatpush1.msra.mxu0 0.0
    %932 = vmatprep.subr.mxu0 0.0
    %933 = vmatpush1.msra.mxu0 0.0
    %934 = vmatprep.subr.mxu0 0.0
    %935 = vmatpush1.msra.mxu0 0.0
    %936 = vmatprep.subr.mxu0 0.0
    %937 = vmatpush1.msra.mxu0 0.0
    %938 = vmatprep.subr.mxu0 0.0
    %939 = vmatpush1.msra.mxu0 0.0
    %940 = vmatprep.subr.mxu0 0.0
    %941 = vmatpush1.msra.mxu0 0.0
    %942 = vmatprep.subr.mxu0 0.0
    %943 = vmatpush1.msra.mxu0 0.0
    %944 = vmatprep.subr.mxu0 0.0
    %945 = vmatpush1.msra.mxu0 0.0
    %946 = vmatprep.subr.mxu0 0.0
    %947 = vmatpush1.msra.mxu0 0.0
    %948 = vmatprep.subr.mxu0 0.0
    %949 = vmatpush1.msra.mxu0 0.0
    %950 = vmatprep.subr.mxu0 0.0
    %951 = vmatpush1.msra.mxu0 0.0
    %952 = vmatprep.subr.mxu0 0.0
    %953 = vmatpush1.msra.mxu0 0.0
    %954 = vmatprep.subr.mxu0 0.0
    %955 = vmatpush1.msra.mxu0 0.0
    %956 = vmatprep.subr.mxu0 0.0
    %957 = vmatpush1.msra.mxu0 0.0
    %958 = vmatprep.subr.mxu0 0.0
    %959 = vmatpush1.msra.mxu0 0.0
    %960 = vmatprep.subr.mxu0 0.0
    %961 = vmatpush1.msra.mxu0 0.0
    %962 = vmatprep.subr.mxu0 0.0
    %963 = vmatpush1.msra.mxu0 0.0
    %964 = vmatprep.subr.mxu0 0.0
    %965 = vmatpush1.msra.mxu0 0.0
    %966 = vmatprep.subr.mxu0 0.0
    %967 = vmatpush1.msra.mxu0 0.0
    %968 = vmatprep.subr.mxu0 0.0
    %969 = vmatpush1.msra.mxu0 0.0
    %970 = vmatprep.subr.mxu0 0.0
    %971 = vmatpush1.msra.mxu0 0.0
    %972 = vmatprep.subr.mxu0 0.0
    %973 = vmatpush1.msra.mxu0 0.0
    %974 = vmatprep.subr.mxu0 0.0
    %975 = vmatpush1.msra.mxu0 0.0
    %976 = vmatprep.subr.mxu0 0.0
    %977 = vmatpush1.msra.mxu0 0.0
    %978 = vmatprep.subr.mxu0 0.0
    %979 = vmatpush1.msra.mxu0 0.0
    %980 = vmatprep.mubr.f32.mxu0 0.0
    %981 = vmatmul.mubr.f32.gmra.mrb[0].mxu0 %v752
    %v982 = vpop.f32.mrb[0].mxu0
    %v983 = vadd.f32 %v371, %v982
    %v984 = vpop.f32.mrb[0].mxu0
    %985 = vdwg.mxu0
    %v987 = vrot.slane %v983, 4
    %v989 = vmul.f32 %v903, %v987
    %991 = vrot.lane.b32.xlu0 %v989, 64
    %v992 = vpop.permute.xlu0 %991
    %v994 = vadd.f32 %v185, %v992
    %v995 = vtanh.pop %v994
    %v997 = vrot.slane %v995, 2
    %v999 = vsub.f32 %v734, %v997
    %v1001 = vrot.slane %v999, 6
    %1002 = vrot.lane.b32.xlu0 %v1001, 96
    %v1003 = vpop.permute.xlu0 %1002
    %v1005 = vmul.f32 %v915, %v1003
    %1007 = vrot.lane.b32.xlu0 %v1005, 32
    %v1008 = vpop.permute.xlu0 %1007
    %v1010 = vadd.f32 %v995, %v1008
    %v1012 = vcombine.high %v1010, %v1010
    %v1014 = vunpack.c.l.s4 1983009808
    %v1015 = vunpack.c.0.s8 %v1014
    %v1016 = vlaneseq
    %v1017 = vshrl.u32 %v1016, 7
    %v1018 = vsub.s32 %v1015, %v1017
    %v1019 = vrot.slane %v1012, %v1018
    %vm1021 = vcmask 779776
    %1022 = vst.msk [vmem:[#allocation11] sm:$0x3] %vm1021, %v1019
    %v1023 = vrot.slane %v1010, 4
    %1024 = vrot.lane.b32.xlu0 %v1023, 64
    %v1025 = vpop.permute.xlu0 %1024
    %v1026 = vsel %vm111, %v1025, 0
    %1028 = vmatprep.subr.mxu0 0.0
    %1029 = vmatpush1.msra.mxu0 %v193
    %1030 = vmatprep.subr.mxu0 0.0
    %1031 = vmatpush1.msra.mxu0 %v194
    %1032 = vmatprep.subr.mxu0 0.0
    %1033 = vmatpush1.msra.mxu0 %v195
    %1034 = vmatprep.subr.mxu0 0.0
    %1035 = vmatpush1.msra.mxu0 %v196
    %1036 = vmatprep.subr.mxu0 0.0
    %1037 = vmatpush1.msra.mxu0 0.0
    %1038 = vmatprep.subr.mxu0 0.0
    %1039 = vmatpush1.msra.mxu0 0.0
    %1040 = vmatprep.subr.mxu0 0.0
    %1041 = vmatpush1.msra.mxu0 0.0
    %1042 = vmatprep.subr.mxu0 0.0
    %1043 = vmatpush1.msra.mxu0 0.0
    %1044 = vmatprep.subr.mxu0 0.0
    %1045 = vmatpush1.msra.mxu0 0.0
    %1046 = vmatprep.subr.mxu0 0.0
    %1047 = vmatpush1.msra.mxu0 0.0
    %1048 = vmatprep.subr.mxu0 0.0
    %1049 = vmatpush1.msra.mxu0 0.0
    %1050 = vmatprep.subr.mxu0 0.0
    %1051 = vmatpush1.msra.mxu0 0.0
    %1052 = vmatprep.subr.mxu0 0.0
    %1053 = vmatpush1.msra.mxu0 0.0
    %1054 = vmatprep.subr.mxu0 0.0
    %1055 = vmatpush1.msra.mxu0 0.0
    %1056 = vmatprep.subr.mxu0 0.0
    %1057 = vmatpush1.msra.mxu0 0.0
    %1058 = vmatprep.subr.mxu0 0.0
    %1059 = vmatpush1.msra.mxu0 0.0
    %1060 = vmatprep.subr.mxu0 0.0
    %1061 = vmatpush1.msra.mxu0 0.0
    %1062 = vmatprep.subr.mxu0 0.0
    %1063 = vmatpush1.msra.mxu0 0.0
    %1064 = vmatprep.subr.mxu0 0.0
    %1065 = vmatpush1.msra.mxu0 0.0
    %1066 = vmatprep.subr.mxu0 0.0
    %1067 = vmatpush1.msra.mxu0 0.0
    %1068 = vmatprep.subr.mxu0 0.0
    %1069 = vmatpush1.msra.mxu0 0.0
    %1070 = vmatprep.subr.mxu0 0.0
    %1071 = vmatpush1.msra.mxu0 0.0
    %1072 = vmatprep.subr.mxu0 0.0
    %1073 = vmatpush1.msra.mxu0 0.0
    %1074 = vmatprep.subr.mxu0 0.0
    %1075 = vmatpush1.msra.mxu0 0.0
    %1076 = vmatprep.subr.mxu0 0.0
    %1077 = vmatpush1.msra.mxu0 0.0
    %1078 = vmatprep.subr.mxu0 0.0
    %1079 = vmatpush1.msra.mxu0 0.0
    %1080 = vmatprep.subr.mxu0 0.0
    %1081 = vmatpush1.msra.mxu0 0.0
    %1082 = vmatprep.subr.mxu0 0.0
    %1083 = vmatpush1.msra.mxu0 0.0
    %1084 = vmatprep.subr.mxu0 0.0
    %1085 = vmatpush1.msra.mxu0 0.0
    %1086 = vmatprep.subr.mxu0 0.0
    %1087 = vmatpush1.msra.mxu0 0.0
    %1088 = vmatprep.subr.mxu0 0.0
    %1089 = vmatpush1.msra.mxu0 0.0
    %1090 = vmatprep.subr.mxu0 0.0
    %1091 = vmatpush1.msra.mxu0 0.0
    %1092 = vmatprep.mubr.f32.mxu0 0.0
    %1093 = vmatmul.mubr.f32.gmra.mrb[0].mxu0 %v1026
    %v1094 = vpop.f32.mrb[0].mxu0
    %v1095 = vadd.f32 0.0, %v1094
    %v1096 = vpop.f32.mrb[0].mxu0
    %1097 = vdwg.mxu0
    %1098 = vmatprep.subr.mxu0 0.0
    %1099 = vmatpush1.msra.mxu0 %v197
    %1100 = vmatprep.subr.mxu0 0.0
    %1101 = vmatpush1.msra.mxu0 %v198
    %1102 = vmatprep.subr.mxu0 0.0
    %1103 = vmatpush1.msra.mxu0 %v199
    %1104 = vmatprep.subr.mxu0 0.0
    %1105 = vmatpush1.msra.mxu0 %v200
    %1106 = vmatprep.subr.mxu0 0.0
    %1107 = vmatpush1.msra.mxu0 0.0
    %1108 = vmatprep.subr.mxu0 0.0
    %1109 = vmatpush1.msra.mxu0 0.0
    %1110 = vmatprep.subr.mxu0 0.0
    %1111 = vmatpush1.msra.mxu0 0.0
    %1112 = vmatprep.subr.mxu0 0.0
    %1113 = vmatpush1.msra.mxu0 0.0
    %1114 = vmatprep.subr.mxu0 0.0
    %1115 = vmatpush1.msra.mxu0 0.0
    %1116 = vmatprep.subr.mxu0 0.0
    %1117 = vmatpush1.msra.mxu0 0.0
    %1118 = vmatprep.subr.mxu0 0.0
    %1119 = vmatpush1.msra.mxu0 0.0
    %1120 = vmatprep.subr.mxu0 0.0
    %1121 = vmatpush1.msra.mxu0 0.0
    %1122 = vmatprep.subr.mxu0 0.0
    %1123 = vmatpush1.msra.mxu0 0.0
    %1124 = vmatprep.subr.mxu0 0.0
    %1125 = vmatpush1.msra.mxu0 0.0
    %1126 = vmatprep.subr.mxu0 0.0
    %1127 = vmatpush1.msra.mxu0 0.0
    %1128 = vmatprep.subr.mxu0 0.0
    %1129 = vmatpush1.msra.mxu0 0.0
    %1130 = vmatprep.subr.mxu0 0.0
    %1131 = vmatpush1.msra.mxu0 0.0
    %1132 = vmatprep.subr.mxu0 0.0
    %1133 = vmatpush1.msra.mxu0 0.0
    %1134 = vmatprep.subr.mxu0 0.0
    %1135 = vmatpush1.msra.mxu0 0.0
    %1136 = vmatprep.subr.mxu0 0.0
    %1137 = vmatpush1.msra.mxu0 0.0
    %1138 = vmatprep.subr.mxu0 0.0
    %1139 = vmatpush1.msra.mxu0 0.0
    %1140 = vmatprep.subr.mxu0 0.0
    %1141 = vmatpush1.msra.mxu0 0.0
    %1142 = vmatprep.subr.mxu0 0.0
    %1143 = vmatpush1.msra.mxu0 0.0
    %1144 = vmatprep.subr.mxu0 0.0
    %1145 = vmatpush1.msra.mxu0 0.0
    %1146 = vmatprep.subr.mxu0 0.0
    %1147 = vmatpush1.msra.mxu0 0.0
    %1148 = vmatprep.subr.mxu0 0.0
    %1149 = vmatpush1.msra.mxu0 0.0
    %1150 = vmatprep.subr.mxu0 0.0
    %1151 = vmatpush1.msra.mxu0 0.0
    %1152 = vmatprep.subr.mxu0 0.0
    %1153 = vmatpush1.msra.mxu0 0.0
    %1154 = vmatprep.subr.mxu0 0.0
    %1155 = vmatpush1.msra.mxu0 0.0
    %1156 = vmatprep.subr.mxu0 0.0
    %1157 = vmatpush1.msra.mxu0 0.0
    %1158 = vmatprep.subr.mxu0 0.0
    %1159 = vmatpush1.msra.mxu0 0.0
    %1160 = vmatprep.subr.mxu0 0.0
    %1161 = vmatpush1.msra.mxu0 0.0
    %1162 = vmatprep.mubr.f32.mxu0 0.0
    %1163 = vmatmul.mubr.f32.gmra.mrb[0].mxu0 %v1026
    %v1164 = vpop.f32.mrb[0].mxu0
    %v1165 = vadd.f32 0.0, %v1164
    %v1166 = vpop.f32.mrb[0].mxu0
    %1167 = vdwg.mxu0
    %v1169 = vrot.slane %v1095, 2
    %v1171 = vadd.f32 %v185, %v1169
    %v1172 = vxor.u32 %v1171, 2147483648
    %v1173 = vmul.f32 %v1172, 1.442695
    %v1174 = vpow.pop %v1173
    %v1175 = vadd.f32 %v1174, 1.0
    %v1176 = vrcp.pop %v1175
    %v1177 = vmul.f32 1.0, %v1176
    %v1179 = vrot.slane %v1165, 2
    %1180 = vrot.lane.b32.xlu0 %v1179, 32
    %v1181 = vpop.permute.xlu0 %1180
    %v1183 = vadd.f32 %v185, %v1181
    %v1184 = vxor.u32 %v1183, 2147483648
    %v1185 = vmul.f32 %v1184, 1.442695
    %v1186 = vpow.pop %v1185
    %v1187 = vadd.f32 %v1186, 1.0
    %v1188 = vrcp.pop %v1187
    %v1189 = vmul.f32 1.0, %v1188
    %1190 = vmatprep.subr.mxu0 0.0
    %1191 = vmatpush1.msra.mxu0 %v201
    %1192 = vmatprep.subr.mxu0 0.0
    %1193 = vmatpush1.msra.mxu0 %v202
    %1194 = vmatprep.subr.mxu0 0.0
    %1195 = vmatpush1.msra.mxu0 %v203
    %1196 = vmatprep.subr.mxu0 0.0
    %1197 = vmatpush1.msra.mxu0 %v204
    %1198 = vmatprep.subr.mxu0 0.0
    %1199 = vmatpush1.msra.mxu0 0.0
    %1200 = vmatprep.subr.mxu0 0.0
    %1201 = vmatpush1.msra.mxu0 0.0
    %1202 = vmatprep.subr.mxu0 0.0
    %1203 = vmatpush1.msra.mxu0 0.0
    %1204 = vmatprep.subr.mxu0 0.0
    %1205 = vmatpush1.msra.mxu0 0.0
    %1206 = vmatprep.subr.mxu0 0.0
    %1207 = vmatpush1.msra.mxu0 0.0
    %1208 = vmatprep.subr.mxu0 0.0
    %1209 = vmatpush1.msra.mxu0 0.0
    %1210 = vmatprep.subr.mxu0 0.0
    %1211 = vmatpush1.msra.mxu0 0.0
    %1212 = vmatprep.subr.mxu0 0.0
    %1213 = vmatpush1.msra.mxu0 0.0
    %1214 = vmatprep.subr.mxu0 0.0
    %1215 = vmatpush1.msra.mxu0 0.0
    %1216 = vmatprep.subr.mxu0 0.0
    %1217 = vmatpush1.msra.mxu0 0.0
    %1218 = vmatprep.subr.mxu0 0.0
    %1219 = vmatpush1.msra.mxu0 0.0
    %1220 = vmatprep.subr.mxu0 0.0
    %1221 = vmatpush1.msra.mxu0 0.0
    %1222 = vmatprep.subr.mxu0 0.0
    %1223 = vmatpush1.msra.mxu0 0.0
    %1224 = vmatprep.subr.mxu0 0.0
    %1225 = vmatpush1.msra.mxu0 0.0
    %1226 = vmatprep.subr.mxu0 0.0
    %1227 = vmatpush1.msra.mxu0 0.0
    %1228 = vmatprep.subr.mxu0 0.0
    %1229 = vmatpush1.msra.mxu0 0.0
    %1230 = vmatprep.subr.mxu0 0.0
    %1231 = vmatpush1.msra.mxu0 0.0
    %1232 = vmatprep.subr.mxu0 0.0
    %1233 = vmatpush1.msra.mxu0 0.0
    %1234 = vmatprep.subr.mxu0 0.0
    %1235 = vmatpush1.msra.mxu0 0.0
    %1236 = vmatprep.subr.mxu0 0.0
    %1237 = vmatpush1.msra.mxu0 0.0
    %1238 = vmatprep.subr.mxu0 0.0
    %1239 = vmatpush1.msra.mxu0 0.0
    %1240 = vmatprep.subr.mxu0 0.0
    %1241 = vmatpush1.msra.mxu0 0.0
    %1242 = vmatprep.subr.mxu0 0.0
    %1243 = vmatpush1.msra.mxu0 0.0
    %1244 = vmatprep.subr.mxu0 0.0
    %1245 = vmatpush1.msra.mxu0 0.0
    %1246 = vmatprep.subr.mxu0 0.0
    %1247 = vmatpush1.msra.mxu0 0.0
    %1248 = vmatprep.subr.mxu0 0.0
    %1249 = vmatpush1.msra.mxu0 0.0
    %1250 = vmatprep.subr.mxu0 0.0
    %1251 = vmatpush1.msra.mxu0 0.0
    %1252 = vmatprep.subr.mxu0 0.0
    %1253 = vmatpush1.msra.mxu0 0.0
    %1254 = vmatprep.mubr.f32.mxu0 0.0
    %1255 = vmatmul.mubr.f32.gmra.mrb[0].mxu0 %v1026
    %v1256 = vpop.f32.mrb[0].mxu0
    %v1257 = vadd.f32 %v371, %v1256
    %v1258 = vpop.f32.mrb[0].mxu0
    %1259 = vdwg.mxu0
    %v1261 = vrot.slane %v1257, 2
    %v1263 = vmul.f32 %v1177, %v1261
    %1265 = vrot.lane.b32.xlu0 %v1263, 64
    %v1266 = vpop.permute.xlu0 %1265
    %v1268 = vadd.f32 %v185, %v1266
    %v1269 = vtanh.pop %v1268
    %v1271 = vrot.slane %v1269, 2
    %v1273 = vsub.f32 %v1010, %v1271
    %v1275 = vrot.slane %v1273, 6
    %1276 = vrot.lane.b32.xlu0 %v1275, 96
    %v1277 = vpop.permute.xlu0 %1276
    %v1279 = vmul.f32 %v1189, %v1277
    %1281 = vrot.lane.b32.xlu0 %v1279, 32
    %v1282 = vpop.permute.xlu0 %1281
    %v1284 = vadd.f32 %v1269, %v1282
    %v1286 = vcombine.high %v1284, %v1284
    %v1288 = vunpack.c.l.s4 1983009808
    %v1289 = vunpack.c.0.s8 %v1288
    %v1290 = vlaneseq
    %v1291 = vshrl.u32 %v1290, 7
    %v1292 = vsub.s32 %v1289, %v1291
    %v1293 = vrot.slane %v1286, %v1292
    %v1294 = vcombine.high %v1293, %v1293
    %1295 = vrot.lane.b32.xlu0 %v1294, 32
    %v1296 = vpop.permute.xlu0 %1295
    %vm1298 = vcmask 1042176
    %1299 = vst.msk [vmem:[#allocation11] sm:$0x3] %vm1298, %v1296
    %v1300 = vrot.slane %v1284, 6
    %1301 = vrot.lane.b32.xlu0 %v1300, 64
    %v1302 = vpop.permute.xlu0 %1301
    %v1303 = vsel %vm111, %v1302, 0
    %1305 = vmatprep.subr.mxu0 0.0
    %1306 = vmatpush1.msra.mxu0 %v193
    %1307 = vmatprep.subr.mxu0 0.0
    %1308 = vmatpush1.msra.mxu0 %v194
    %1309 = vmatprep.subr.mxu0 0.0
    %1310 = vmatpush1.msra.mxu0 %v195
    %1311 = vmatprep.subr.mxu0 0.0
    %1312 = vmatpush1.msra.mxu0 %v196
    %1313 = vmatprep.subr.mxu0 0.0
    %1314 = vmatpush1.msra.mxu0 0.0
    %1315 = vmatprep.subr.mxu0 0.0
    %1316 = vmatpush1.msra.mxu0 0.0
    %1317 = vmatprep.subr.mxu0 0.0
    %1318 = vmatpush1.msra.mxu0 0.0
    %1319 = vmatprep.subr.mxu0 0.0
    %1320 = vmatpush1.msra.mxu0 0.0
    %1321 = vmatprep.subr.mxu0 0.0
    %1322 = vmatpush1.msra.mxu0 0.0
    %1323 = vmatprep.subr.mxu0 0.0
    %1324 = vmatpush1.msra.mxu0 0.0
    %1325 = vmatprep.subr.mxu0 0.0
    %1326 = vmatpush1.msra.mxu0 0.0
    %1327 = vmatprep.subr.mxu0 0.0
    %1328 = vmatpush1.msra.mxu0 0.0
    %1329 = vmatprep.subr.mxu0 0.0
    %1330 = vmatpush1.msra.mxu0 0.0
    %1331 = vmatprep.subr.mxu0 0.0
    %1332 = vmatpush1.msra.mxu0 0.0
    %1333 = vmatprep.subr.mxu0 0.0
    %1334 = vmatpush1.msra.mxu0 0.0
    %1335 = vmatprep.subr.mxu0 0.0
    %1336 = vmatpush1.msra.mxu0 0.0
    %1337 = vmatprep.subr.mxu0 0.0
    %1338 = vmatpush1.msra.mxu0 0.0
    %1339 = vmatprep.subr.mxu0 0.0
    %1340 = vmatpush1.msra.mxu0 0.0
    %1341 = vmatprep.subr.mxu0 0.0
    %1342 = vmatpush1.msra.mxu0 0.0
    %1343 = vmatprep.subr.mxu0 0.0
    %1344 = vmatpush1.msra.mxu0 0.0
    %1345 = vmatprep.subr.mxu0 0.0
    %1346 = vmatpush1.msra.mxu0 0.0
    %1347 = vmatprep.subr.mxu0 0.0
    %1348 = vmatpush1.msra.mxu0 0.0
    %1349 = vmatprep.subr.mxu0 0.0
    %1350 = vmatpush1.msra.mxu0 0.0
    %1351 = vmatprep.subr.mxu0 0.0
    %1352 = vmatpush1.msra.mxu0 0.0
    %1353 = vmatprep.subr.mxu0 0.0
    %1354 = vmatpush1.msra.mxu0 0.0
    %1355 = vmatprep.subr.mxu0 0.0
    %1356 = vmatpush1.msra.mxu0 0.0
    %1357 = vmatprep.subr.mxu0 0.0
    %1358 = vmatpush1.msra.mxu0 0.0
    %1359 = vmatprep.subr.mxu0 0.0
    %1360 = vmatpush1.msra.mxu0 0.0
    %1361 = vmatprep.subr.mxu0 0.0
    %1362 = vmatpush1.msra.mxu0 0.0
    %1363 = vmatprep.subr.mxu0 0.0
    %1364 = vmatpush1.msra.mxu0 0.0
    %1365 = vmatprep.subr.mxu0 0.0
    %1366 = vmatpush1.msra.mxu0 0.0
    %1367 = vmatprep.subr.mxu0 0.0
    %1368 = vmatpush1.msra.mxu0 0.0
    %1369 = vmatprep.mubr.f32.mxu0 0.0
    %1370 = vmatmul.mubr.f32.gmra.mrb[0].mxu0 %v1303
    %v1371 = vpop.f32.mrb[0].mxu0
    %v1372 = vadd.f32 0.0, %v1371
    %v1373 = vpop.f32.mrb[0].mxu0
    %1374 = vdwg.mxu0
    %1375 = vmatprep.subr.mxu0 0.0
    %1376 = vmatpush1.msra.mxu0 %v197
    %1377 = vmatprep.subr.mxu0 0.0
    %1378 = vmatpush1.msra.mxu0 %v198
    %1379 = vmatprep.subr.mxu0 0.0
    %1380 = vmatpush1.msra.mxu0 %v199
    %1381 = vmatprep.subr.mxu0 0.0
    %1382 = vmatpush1.msra.mxu0 %v200
    %1383 = vmatprep.subr.mxu0 0.0
    %1384 = vmatpush1.msra.mxu0 0.0
    %1385 = vmatprep.subr.mxu0 0.0
    %1386 = vmatpush1.msra.mxu0 0.0
    %1387 = vmatprep.subr.mxu0 0.0
    %1388 = vmatpush1.msra.mxu0 0.0
    %1389 = vmatprep.subr.mxu0 0.0
    %1390 = vmatpush1.msra.mxu0 0.0
    %1391 = vmatprep.subr.mxu0 0.0
    %1392 = vmatpush1.msra.mxu0 0.0
    %1393 = vmatprep.subr.mxu0 0.0
    %1394 = vmatpush1.msra.mxu0 0.0
    %1395 = vmatprep.subr.mxu0 0.0
    %1396 = vmatpush1.msra.mxu0 0.0
    %1397 = vmatprep.subr.mxu0 0.0
    %1398 = vmatpush1.msra.mxu0 0.0
    %1399 = vmatprep.subr.mxu0 0.0
    %1400 = vmatpush1.msra.mxu0 0.0
    %1401 = vmatprep.subr.mxu0 0.0
    %1402 = vmatpush1.msra.mxu0 0.0
    %1403 = vmatprep.subr.mxu0 0.0
    %1404 = vmatpush1.msra.mxu0 0.0
    %1405 = vmatprep.subr.mxu0 0.0
    %1406 = vmatpush1.msra.mxu0 0.0
    %1407 = vmatprep.subr.mxu0 0.0
    %1408 = vmatpush1.msra.mxu0 0.0
    %1409 = vmatprep.subr.mxu0 0.0
    %1410 = vmatpush1.msra.mxu0 0.0
    %1411 = vmatprep.subr.mxu0 0.0
    %1412 = vmatpush1.msra.mxu0 0.0
    %1413 = vmatprep.subr.mxu0 0.0
    %1414 = vmatpush1.msra.mxu0 0.0
    %1415 = vmatprep.subr.mxu0 0.0
    %1416 = vmatpush1.msra.mxu0 0.0
    %1417 = vmatprep.subr.mxu0 0.0
    %1418 = vmatpush1.msra.mxu0 0.0
    %1419 = vmatprep.subr.mxu0 0.0
    %1420 = vmatpush1.msra.mxu0 0.0
    %1421 = vmatprep.subr.mxu0 0.0
    %1422 = vmatpush1.msra.mxu0 0.0
    %1423 = vmatprep.subr.mxu0 0.0
    %1424 = vmatpush1.msra.mxu0 0.0
    %1425 = vmatprep.subr.mxu0 0.0
    %1426 = vmatpush1.msra.mxu0 0.0
    %1427 = vmatprep.subr.mxu0 0.0
    %1428 = vmatpush1.msra.mxu0 0.0
    %1429 = vmatprep.subr.mxu0 0.0
    %1430 = vmatpush1.msra.mxu0 0.0
    %1431 = vmatprep.subr.mxu0 0.0
    %1432 = vmatpush1.msra.mxu0 0.0
    %1433 = vmatprep.subr.mxu0 0.0
    %1434 = vmatpush1.msra.mxu0 0.0
    %1435 = vmatprep.subr.mxu0 0.0
    %1436 = vmatpush1.msra.mxu0 0.0
    %1437 = vmatprep.subr.mxu0 0.0
    %1438 = vmatpush1.msra.mxu0 0.0
    %1439 = vmatprep.mubr.f32.mxu0 0.0
    %1440 = vmatmul.mubr.f32.gmra.mrb[0].mxu0 %v1303
    %v1441 = vpop.f32.mrb[0].mxu0
    %v1442 = vadd.f32 0.0, %v1441
    %v1443 = vpop.f32.mrb[0].mxu0
    %1444 = vdwg.mxu0
    %v1445 = vadd.f32 %v190, %v1372
    %v1446 = vxor.u32 %v1445, 2147483648
    %v1447 = vmul.f32 %v1446, 1.442695
    %v1448 = vpow.pop %v1447
    %v1449 = vadd.f32 %v1448, 1.0
    %v1450 = vrcp.pop %v1449
    %v1451 = vmul.f32 1.0, %v1450
    %1453 = vrot.lane.b32.xlu0 %v1442, 32
    %v1454 = vpop.permute.xlu0 %1453
    %v1456 = vadd.f32 %v190, %v1454
    %v1457 = vxor.u32 %v1456, 2147483648
    %v1458 = vmul.f32 %v1457, 1.442695
    %v1459 = vpow.pop %v1458
    %v1460 = vadd.f32 %v1459, 1.0
    %v1461 = vrcp.pop %v1460
    %v1462 = vmul.f32 1.0, %v1461
    %1463 = vmatprep.subr.mxu0 0.0
    %1464 = vmatpush1.msra.mxu0 %v201
    %1465 = vmatprep.subr.mxu0 0.0
    %1466 = vmatpush1.msra.mxu0 %v202
    %1467 = vmatprep.subr.mxu0 0.0
    %1468 = vmatpush1.msra.mxu0 %v203
    %1469 = vmatprep.subr.mxu0 0.0
    %1470 = vmatpush1.msra.mxu0 %v204
    %1471 = vmatprep.subr.mxu0 0.0
    %1472 = vmatpush1.msra.mxu0 0.0
    %1473 = vmatprep.subr.mxu0 0.0
    %1474 = vmatpush1.msra.mxu0 0.0
    %1475 = vmatprep.subr.mxu0 0.0
    %1476 = vmatpush1.msra.mxu0 0.0
    %1477 = vmatprep.subr.mxu0 0.0
    %1478 = vmatpush1.msra.mxu0 0.0
    %1479 = vmatprep.subr.mxu0 0.0
    %1480 = vmatpush1.msra.mxu0 0.0
    %1481 = vmatprep.subr.mxu0 0.0
    %1482 = vmatpush1.msra.mxu0 0.0
    %1483 = vmatprep.subr.mxu0 0.0
    %1484 = vmatpush1.msra.mxu0 0.0
    %1485 = vmatprep.subr.mxu0 0.0
    %1486 = vmatpush1.msra.mxu0 0.0
    %1487 = vmatprep.subr.mxu0 0.0
    %1488 = vmatpush1.msra.mxu0 0.0
    %1489 = vmatprep.subr.mxu0 0.0
    %1490 = vmatpush1.msra.mxu0 0.0
    %1491 = vmatprep.subr.mxu0 0.0
    %1492 = vmatpush1.msra.mxu0 0.0
    %1493 = vmatprep.subr.mxu0 0.0
    %1494 = vmatpush1.msra.mxu0 0.0
    %1495 = vmatprep.subr.mxu0 0.0
    %1496 = vmatpush1.msra.mxu0 0.0
    %1497 = vmatprep.subr.mxu0 0.0
    %1498 = vmatpush1.msra.mxu0 0.0
    %1499 = vmatprep.subr.mxu0 0.0
    %1500 = vmatpush1.msra.mxu0 0.0
    %1501 = vmatprep.subr.mxu0 0.0
    %1502 = vmatpush1.msra.mxu0 0.0
    %1503 = vmatprep.subr.mxu0 0.0
    %1504 = vmatpush1.msra.mxu0 0.0
    %1505 = vmatprep.subr.mxu0 0.0
    %1506 = vmatpush1.msra.mxu0 0.0
    %1507 = vmatprep.subr.mxu0 0.0
    %1508 = vmatpush1.msra.mxu0 0.0
    %1509 = vmatprep.subr.mxu0 0.0
    %1510 = vmatpush1.msra.mxu0 0.0
    %1511 = vmatprep.subr.mxu0 0.0
    %1512 = vmatpush1.msra.mxu0 0.0
    %1513 = vmatprep.subr.mxu0 0.0
    %1514 = vmatpush1.msra.mxu0 0.0
    %1515 = vmatprep.subr.mxu0 0.0
    %1516 = vmatpush1.msra.mxu0 0.0
    %1517 = vmatprep.subr.mxu0 0.0
    %1518 = vmatpush1.msra.mxu0 0.0
    %1519 = vmatprep.subr.mxu0 0.0
    %1520 = vmatpush1.msra.mxu0 0.0
    %1521 = vmatprep.subr.mxu0 0.0
    %1522 = vmatpush1.msra.mxu0 0.0
    %1523 = vmatprep.subr.mxu0 0.0
    %1524 = vmatpush1.msra.mxu0 0.0
    %1525 = vmatprep.subr.mxu0 0.0
    %1526 = vmatpush1.msra.mxu0 0.0
    %1527 = vmatprep.mubr.f32.mxu0 0.0
    %1528 = vmatmul.mubr.f32.gmra.mrb[0].mxu0 %v1303
    %v1529 = vpop.f32.mrb[0].mxu0
    %v1530 = vadd.f32 %v371, %v1529
    %v1531 = vpop.f32.mrb[0].mxu0
    %1532 = vdwg.mxu0
    %v1533 = vmul.f32 %v1451, %v1530
    %1535 = vrot.lane.b32.xlu0 %v1533, 64
    %v1536 = vpop.permute.xlu0 %1535
    %v1538 = vadd.f32 %v190, %v1536
    %v1539 = vtanh.pop %v1538
    %v1541 = vrot.slane %v1539, 2
    %v1543 = vsub.f32 %v1284, %v1541
    %v1545 = vrot.slane %v1543, 6
    %1546 = vrot.lane.b32.xlu0 %v1545, 96
    %v1547 = vpop.permute.xlu0 %1546
    %v1549 = vmul.f32 %v1462, %v1547
    %1551 = vrot.lane.b32.xlu0 %v1549, 32
    %v1552 = vpop.permute.xlu0 %1551
    %v1554 = vadd.f32 %v1539, %v1552
    %v1557 = vunpack.c.l.s4 1983009808
    %v1558 = vunpack.c.0.s8 %v1557
    %v1559 = vlaneseq
    %v1560 = vshrl.u32 %v1559, 7
    %v1561 = vsub.s32 %v1558, %v1560
    %v1562 = vrot.slane %v1554, %v1561
    %1563 = vrot.lane.b32.xlu0 %v1562, 64
    %v1564 = vpop.permute.xlu0 %1563
    %1566 = vst.msk [vmem:[#allocation11 + $0x2] sm:$0x3] %vm472, %v1564
    %1567 = vrot.lane.b32.xlu0 %v1554, 64
    %v1568 = vpop.permute.xlu0 %1567
    %v1569 = vsel %vm111, %v1568, 0
    %1571 = vmatprep.subr.mxu0 0.0
    %1572 = vmatpush1.msra.mxu0 %v193
    %1573 = vmatprep.subr.mxu0 0.0
    %1574 = vmatpush1.msra.mxu0 %v194
    %1575 = vmatprep.subr.mxu0 0.0
    %1576 = vmatpush1.msra.mxu0 %v195
    %1577 = vmatprep.subr.mxu0 0.0
    %1578 = vmatpush1.msra.mxu0 %v196
    %1579 = vmatprep.subr.mxu0 0.0
    %1580 = vmatpush1.msra.mxu0 0.0
    %1581 = vmatprep.subr.mxu0 0.0
    %1582 = vmatpush1.msra.mxu0 0.0
    %1583 = vmatprep.subr.mxu0 0.0
    %1584 = vmatpush1.msra.mxu0 0.0
    %1585 = vmatprep.subr.mxu0 0.0
    %1586 = vmatpush1.msra.mxu0 0.0
    %1587 = vmatprep.subr.mxu0 0.0
    %1588 = vmatpush1.msra.mxu0 0.0
    %1589 = vmatprep.subr.mxu0 0.0
    %1590 = vmatpush1.msra.mxu0 0.0
    %1591 = vmatprep.subr.mxu0 0.0
    %1592 = vmatpush1.msra.mxu0 0.0
    %1593 = vmatprep.subr.mxu0 0.0
    %1594 = vmatpush1.msra.mxu0 0.0
    %1595 = vmatprep.subr.mxu0 0.0
    %1596 = vmatpush1.msra.mxu0 0.0
    %1597 = vmatprep.subr.mxu0 0.0
    %1598 = vmatpush1.msra.mxu0 0.0
    %1599 = vmatprep.subr.mxu0 0.0
    %1600 = vmatpush1.msra.mxu0 0.0
    %1601 = vmatprep.subr.mxu0 0.0
    %1602 = vmatpush1.msra.mxu0 0.0
    %1603 = vmatprep.subr.mxu0 0.0
    %1604 = vmatpush1.msra.mxu0 0.0
    %1605 = vmatprep.subr.mxu0 0.0
    %1606 = vmatpush1.msra.mxu0 0.0
    %1607 = vmatprep.subr.mxu0 0.0
    %1608 = vmatpush1.msra.mxu0 0.0
    %1609 = vmatprep.subr.mxu0 0.0
    %1610 = vmatpush1.msra.mxu0 0.0
    %1611 = vmatprep.subr.mxu0 0.0
    %1612 = vmatpush1.msra.mxu0 0.0
    %1613 = vmatprep.subr.mxu0 0.0
    %1614 = vmatpush1.msra.mxu0 0.0
    %1615 = vmatprep.subr.mxu0 0.0
    %1616 = vmatpush1.msra.mxu0 0.0
    %1617 = vmatprep.subr.mxu0 0.0
    %1618 = vmatpush1.msra.mxu0 0.0
    %1619 = vmatprep.subr.mxu0 0.0
    %1620 = vmatpush1.msra.mxu0 0.0
    %1621 = vmatprep.subr.mxu0 0.0
    %1622 = vmatpush1.msra.mxu0 0.0
    %1623 = vmatprep.subr.mxu0 0.0
    %1624 = vmatpush1.msra.mxu0 0.0
    %1625 = vmatprep.subr.mxu0 0.0
    %1626 = vmatpush1.msra.mxu0 0.0
    %1627 = vmatprep.subr.mxu0 0.0
    %1628 = vmatpush1.msra.mxu0 0.0
    %1629 = vmatprep.subr.mxu0 0.0
    %1630 = vmatpush1.msra.mxu0 0.0
    %1631 = vmatprep.subr.mxu0 0.0
    %1632 = vmatpush1.msra.mxu0 0.0
    %1633 = vmatprep.subr.mxu0 0.0
    %1634 = vmatpush1.msra.mxu0 0.0
    %1635 = vmatprep.mubr.f32.mxu0 0.0
    %1636 = vmatmul.mubr.f32.gmra.mrb[0].mxu0 %v1569
    %v1637 = vpop.f32.mrb[0].mxu0
    %v1638 = vadd.f32 0.0, %v1637
    %v1639 = vpop.f32.mrb[0].mxu0
    %1640 = vdwg.mxu0
    %1641 = vmatprep.subr.mxu0 0.0
    %1642 = vmatpush1.msra.mxu0 %v197
    %1643 = vmatprep.subr.mxu0 0.0
    %1644 = vmatpush1.msra.mxu0 %v198
    %1645 = vmatprep.subr.mxu0 0.0
    %1646 = vmatpush1.msra.mxu0 %v199
    %1647 = vmatprep.subr.mxu0 0.0
    %1648 = vmatpush1.msra.mxu0 %v200
    %1649 = vmatprep.subr.mxu0 0.0
    %1650 = vmatpush1.msra.mxu0 0.0
    %1651 = vmatprep.subr.mxu0 0.0
    %1652 = vmatpush1.msra.mxu0 0.0
    %1653 = vmatprep.subr.mxu0 0.0
    %1654 = vmatpush1.msra.mxu0 0.0
    %1655 = vmatprep.subr.mxu0 0.0
    %1656 = vmatpush1.msra.mxu0 0.0
    %1657 = vmatprep.subr.mxu0 0.0
    %1658 = vmatpush1.msra.mxu0 0.0
    %1659 = vmatprep.subr.mxu0 0.0
    %1660 = vmatpush1.msra.mxu0 0.0
    %1661 = vmatprep.subr.mxu0 0.0
    %1662 = vmatpush1.msra.mxu0 0.0
    %1663 = vmatprep.subr.mxu0 0.0
    %1664 = vmatpush1.msra.mxu0 0.0
    %1665 = vmatprep.subr.mxu0 0.0
    %1666 = vmatpush1.msra.mxu0 0.0
    %1667 = vmatprep.subr.mxu0 0.0
    %1668 = vmatpush1.msra.mxu0 0.0
    %1669 = vmatprep.subr.mxu0 0.0
    %1670 = vmatpush1.msra.mxu0 0.0
    %1671 = vmatprep.subr.mxu0 0.0
    %1672 = vmatpush1.msra.mxu0 0.0
    %1673 = vmatprep.subr.mxu0 0.0
    %1674 = vmatpush1.msra.mxu0 0.0
    %1675 = vmatprep.subr.mxu0 0.0
    %1676 = vmatpush1.msra.mxu0 0.0
    %1677 = vmatprep.subr.mxu0 0.0
    %1678 = vmatpush1.msra.mxu0 0.0
    %1679 = vmatprep.subr.mxu0 0.0
    %1680 = vmatpush1.msra.mxu0 0.0
    %1681 = vmatprep.subr.mxu0 0.0
    %1682 = vmatpush1.msra.mxu0 0.0
    %1683 = vmatprep.subr.mxu0 0.0
    %1684 = vmatpush1.msra.mxu0 0.0
    %1685 = vmatprep.subr.mxu0 0.0
    %1686 = vmatpush1.msra.mxu0 0.0
    %1687 = vmatprep.subr.mxu0 0.0
    %1688 = vmatpush1.msra.mxu0 0.0
    %1689 = vmatprep.subr.mxu0 0.0
    %1690 = vmatpush1.msra.mxu0 0.0
    %1691 = vmatprep.subr.mxu0 0.0
    %1692 = vmatpush1.msra.mxu0 0.0
    %1693 = vmatprep.subr.mxu0 0.0
    %1694 = vmatpush1.msra.mxu0 0.0
    %1695 = vmatprep.subr.mxu0 0.0
    %1696 = vmatpush1.msra.mxu0 0.0
    %1697 = vmatprep.subr.mxu0 0.0
    %1698 = vmatpush1.msra.mxu0 0.0
    %1699 = vmatprep.subr.mxu0 0.0
    %1700 = vmatpush1.msra.mxu0 0.0
    %1701 = vmatprep.subr.mxu0 0.0
    %1702 = vmatpush1.msra.mxu0 0.0
    %1703 = vmatprep.subr.mxu0 0.0
    %1704 = vmatpush1.msra.mxu0 0.0
    %1705 = vmatprep.mubr.f32.mxu0 0.0
    %1706 = vmatmul.mubr.f32.gmra.mrb[0].mxu0 %v1569
    %v1707 = vpop.f32.mrb[0].mxu0
    %v1708 = vadd.f32 0.0, %v1707
    %v1709 = vpop.f32.mrb[0].mxu0
    %1710 = vdwg.mxu0
    %v1712 = vrot.slane %v1638, 6
    %v1714 = vadd.f32 %v190, %v1712
    %v1715 = vxor.u32 %v1714, 2147483648
    %v1716 = vmul.f32 %v1715, 1.442695
    %v1717 = vpow.pop %v1716
    %v1718 = vadd.f32 %v1717, 1.0
    %v1719 = vrcp.pop %v1718
    %v1720 = vmul.f32 1.0, %v1719
    %v1722 = vrot.slane %v1708, 6
    %1723 = vrot.lane.b32.xlu0 %v1722, 32
    %v1724 = vpop.permute.xlu0 %1723
    %v1726 = vadd.f32 %v190, %v1724
    %v1727 = vxor.u32 %v1726, 2147483648
    %v1728 = vmul.f32 %v1727, 1.442695
    %v1729 = vpow.pop %v1728
    %v1730 = vadd.f32 %v1729, 1.0
    %v1731 = vrcp.pop %v1730
    %v1732 = vmul.f32 1.0, %v1731
    %1733 = vmatprep.subr.mxu0 0.0
    %1734 = vmatpush1.msra.mxu0 %v201
    %1735 = vmatprep.subr.mxu0 0.0
    %1736 = vmatpush1.msra.mxu0 %v202
    %1737 = vmatprep.subr.mxu0 0.0
    %1738 = vmatpush1.msra.mxu0 %v203
    %1739 = vmatprep.subr.mxu0 0.0
    %1740 = vmatpush1.msra.mxu0 %v204
    %1741 = vmatprep.subr.mxu0 0.0
    %1742 = vmatpush1.msra.mxu0 0.0
    %1743 = vmatprep.subr.mxu0 0.0
    %1744 = vmatpush1.msra.mxu0 0.0
    %1745 = vmatprep.subr.mxu0 0.0
    %1746 = vmatpush1.msra.mxu0 0.0
    %1747 = vmatprep.subr.mxu0 0.0
    %1748 = vmatpush1.msra.mxu0 0.0
    %1749 = vmatprep.subr.mxu0 0.0
    %1750 = vmatpush1.msra.mxu0 0.0
    %1751 = vmatprep.subr.mxu0 0.0
    %1752 = vmatpush1.msra.mxu0 0.0
    %1753 = vmatprep.subr.mxu0 0.0
    %1754 = vmatpush1.msra.mxu0 0.0
    %1755 = vmatprep.subr.mxu0 0.0
    %1756 = vmatpush1.msra.mxu0 0.0
    %1757 = vmatprep.subr.mxu0 0.0
    %1758 = vmatpush1.msra.mxu0 0.0
    %1759 = vmatprep.subr.mxu0 0.0
    %1760 = vmatpush1.msra.mxu0 0.0
    %1761 = vmatprep.subr.mxu0 0.0
    %1762 = vmatpush1.msra.mxu0 0.0
    %1763 = vmatprep.subr.mxu0 0.0
    %1764 = vmatpush1.msra.mxu0 0.0
    %1765 = vmatprep.subr.mxu0 0.0
    %1766 = vmatpush1.msra.mxu0 0.0
    %1767 = vmatprep.subr.mxu0 0.0
    %1768 = vmatpush1.msra.mxu0 0.0
    %1769 = vmatprep.subr.mxu0 0.0
    %1770 = vmatpush1.msra.mxu0 0.0
    %1771 = vmatprep.subr.mxu0 0.0
    %1772 = vmatpush1.msra.mxu0 0.0
    %1773 = vmatprep.subr.mxu0 0.0
    %1774 = vmatpush1.msra.mxu0 0.0
    %1775 = vmatprep.subr.mxu0 0.0
    %1776 = vmatpush1.msra.mxu0 0.0
    %1777 = vmatprep.subr.mxu0 0.0
    %1778 = vmatpush1.msra.mxu0 0.0
    %1779 = vmatprep.subr.mxu0 0.0
    %1780 = vmatpush1.msra.mxu0 0.0
    %1781 = vmatprep.subr.mxu0 0.0
    %1782 = vmatpush1.msra.mxu0 0.0
    %1783 = vmatprep.subr.mxu0 0.0
    %1784 = vmatpush1.msra.mxu0 0.0
    %1785 = vmatprep.subr.mxu0 0.0
    %1786 = vmatpush1.msra.mxu0 0.0
    %1787 = vmatprep.subr.mxu0 0.0
    %1788 = vmatpush1.msra.mxu0 0.0
    %1789 = vmatprep.subr.mxu0 0.0
    %1790 = vmatpush1.msra.mxu0 0.0
    %1791 = vmatprep.subr.mxu0 0.0
    %1792 = vmatpush1.msra.mxu0 0.0
    %1793 = vmatprep.subr.mxu0 0.0
    %1794 = vmatpush1.msra.mxu0 0.0
    %1795 = vmatprep.subr.mxu0 0.0
    %1796 = vmatpush1.msra.mxu0 0.0
    %1797 = vmatprep.mubr.f32.mxu0 0.0
    %1798 = vmatmul.mubr.f32.gmra.mrb[0].mxu0 %v1569
    %v1799 = vpop.f32.mrb[0].mxu0
    %v1800 = vadd.f32 %v371, %v1799
    %v1801 = vpop.f32.mrb[0].mxu0
    %1802 = vdwg.mxu0
    %v1804 = vrot.slane %v1800, 6
    %v1806 = vmul.f32 %v1720, %v1804
    %1808 = vrot.lane.b32.xlu0 %v1806, 64
    %v1809 = vpop.permute.xlu0 %1808
    %v1811 = vadd.f32 %v190, %v1809
    %v1812 = vtanh.pop %v1811
    %v1814 = vrot.slane %v1812, 2
    %v1816 = vsub.f32 %v1554, %v1814
    %v1818 = vrot.slane %v1816, 6
    %1819 = vrot.lane.b32.xlu0 %v1818, 96
    %v1820 = vpop.permute.xlu0 %1819
    %v1822 = vmul.f32 %v1732, %v1820
    %1824 = vrot.lane.b32.xlu0 %v1822, 32
    %v1825 = vpop.permute.xlu0 %1824
    %v1827 = vadd.f32 %v1812, %v1825
    %v1830 = vunpack.c.l.s4 1983009808
    %v1831 = vunpack.c.0.s8 %v1830
    %v1832 = vlaneseq
    %v1833 = vshrl.u32 %v1832, 7
    %v1834 = vsub.s32 %v1831, %v1833
    %v1835 = vrot.slane %v1827, %v1834
    %v1836 = vcombine.high %v1835, %v1835
    %1837 = vrot.lane.b32.xlu0 %v1836, 96
    %v1838 = vpop.permute.xlu0 %1837
    %1840 = vst.msk [vmem:[#allocation11 + $0x2] sm:$0x3] %vm747, %v1838
    %v1841 = vrot.slane %v1827, 2
    %1842 = vrot.lane.b32.xlu0 %v1841, 64
    %v1843 = vpop.permute.xlu0 %1842
    %v1844 = vsel %vm111, %v1843, 0
    %1846 = vmatprep.subr.mxu0 0.0
    %1847 = vmatpush1.msra.mxu0 %v193
    %1848 = vmatprep.subr.mxu0 0.0
    %1849 = vmatpush1.msra.mxu0 %v194
    %1850 = vmatprep.subr.mxu0 0.0
    %1851 = vmatpush1.msra.mxu0 %v195
    %1852 = vmatprep.subr.mxu0 0.0
    %1853 = vmatpush1.msra.mxu0 %v196
    %1854 = vmatprep.subr.mxu0 0.0
    %1855 = vmatpush1.msra.mxu0 0.0
    %1856 = vmatprep.subr.mxu0 0.0
    %1857 = vmatpush1.msra.mxu0 0.0
    %1858 = vmatprep.subr.mxu0 0.0
    %1859 = vmatpush1.msra.mxu0 0.0
    %1860 = vmatprep.subr.mxu0 0.0
    %1861 = vmatpush1.msra.mxu0 0.0
    %1862 = vmatprep.subr.mxu0 0.0
    %1863 = vmatpush1.msra.mxu0 0.0
    %1864 = vmatprep.subr.mxu0 0.0
    %1865 = vmatpush1.msra.mxu0 0.0
    %1866 = vmatprep.subr.mxu0 0.0
    %1867 = vmatpush1.msra.mxu0 0.0
    %1868 = vmatprep.subr.mxu0 0.0
    %1869 = vmatpush1.msra.mxu0 0.0
    %1870 = vmatprep.subr.mxu0 0.0
    %1871 = vmatpush1.msra.mxu0 0.0
    %1872 = vmatprep.subr.mxu0 0.0
    %1873 = vmatpush1.msra.mxu0 0.0
    %1874 = vmatprep.subr.mxu0 0.0
    %1875 = vmatpush1.msra.mxu0 0.0
    %1876 = vmatprep.subr.mxu0 0.0
    %1877 = vmatpush1.msra.mxu0 0.0
    %1878 = vmatprep.subr.mxu0 0.0
    %1879 = vmatpush1.msra.mxu0 0.0
    %1880 = vmatprep.subr.mxu0 0.0
    %1881 = vmatpush1.msra.mxu0 0.0
    %1882 = vmatprep.subr.mxu0 0.0
    %1883 = vmatpush1.msra.mxu0 0.0
    %1884 = vmatprep.subr.mxu0 0.0
    %1885 = vmatpush1.msra.mxu0 0.0
    %1886 = vmatprep.subr.mxu0 0.0
    %1887 = vmatpush1.msra.mxu0 0.0
    %1888 = vmatprep.subr.mxu0 0.0
    %1889 = vmatpush1.msra.mxu0 0.0
    %1890 = vmatprep.subr.mxu0 0.0
    %1891 = vmatpush1.msra.mxu0 0.0
    %1892 = vmatprep.subr.mxu0 0.0
    %1893 = vmatpush1.msra.mxu0 0.0
    %1894 = vmatprep.subr.mxu0 0.0
    %1895 = vmatpush1.msra.mxu0 0.0
    %1896 = vmatprep.subr.mxu0 0.0
    %1897 = vmatpush1.msra.mxu0 0.0
    %1898 = vmatprep.subr.mxu0 0.0
    %1899 = vmatpush1.msra.mxu0 0.0
    %1900 = vmatprep.subr.mxu0 0.0
    %1901 = vmatpush1.msra.mxu0 0.0
    %1902 = vmatprep.subr.mxu0 0.0
    %1903 = vmatpush1.msra.mxu0 0.0
    %1904 = vmatprep.subr.mxu0 0.0
    %1905 = vmatpush1.msra.mxu0 0.0
    %1906 = vmatprep.subr.mxu0 0.0
    %1907 = vmatpush1.msra.mxu0 0.0
    %1908 = vmatprep.subr.mxu0 0.0
    %1909 = vmatpush1.msra.mxu0 0.0
    %1910 = vmatprep.mubr.f32.mxu0 0.0
    %1911 = vmatmul.mubr.f32.gmra.mrb[0].mxu0 %v1844
    %v1912 = vpop.f32.mrb[0].mxu0
    %v1913 = vadd.f32 0.0, %v1912
    %v1914 = vpop.f32.mrb[0].mxu0
    %1915 = vdwg.mxu0
    %1916 = vmatprep.subr.mxu0 0.0
    %1917 = vmatpush1.msra.mxu0 %v197
    %1918 = vmatprep.subr.mxu0 0.0
    %1919 = vmatpush1.msra.mxu0 %v198
    %1920 = vmatprep.subr.mxu0 0.0
    %1921 = vmatpush1.msra.mxu0 %v199
    %1922 = vmatprep.subr.mxu0 0.0
    %1923 = vmatpush1.msra.mxu0 %v200
    %1924 = vmatprep.subr.mxu0 0.0
    %1925 = vmatpush1.msra.mxu0 0.0
    %1926 = vmatprep.subr.mxu0 0.0
    %1927 = vmatpush1.msra.mxu0 0.0
    %1928 = vmatprep.subr.mxu0 0.0
    %1929 = vmatpush1.msra.mxu0 0.0
    %1930 = vmatprep.subr.mxu0 0.0
    %1931 = vmatpush1.msra.mxu0 0.0
    %1932 = vmatprep.subr.mxu0 0.0
    %1933 = vmatpush1.msra.mxu0 0.0
    %1934 = vmatprep.subr.mxu0 0.0
    %1935 = vmatpush1.msra.mxu0 0.0
    %1936 = vmatprep.subr.mxu0 0.0
    %1937 = vmatpush1.msra.mxu0 0.0
    %1938 = vmatprep.subr.mxu0 0.0
    %1939 = vmatpush1.msra.mxu0 0.0
    %1940 = vmatprep.subr.mxu0 0.0
    %1941 = vmatpush1.msra.mxu0 0.0
    %1942 = vmatprep.subr.mxu0 0.0
    %1943 = vmatpush1.msra.mxu0 0.0
    %1944 = vmatprep.subr.mxu0 0.0
    %1945 = vmatpush1.msra.mxu0 0.0
    %1946 = vmatprep.subr.mxu0 0.0
    %1947 = vmatpush1.msra.mxu0 0.0
    %1948 = vmatprep.subr.mxu0 0.0
    %1949 = vmatpush1.msra.mxu0 0.0
    %1950 = vmatprep.subr.mxu0 0.0
    %1951 = vmatpush1.msra.mxu0 0.0
    %1952 = vmatprep.subr.mxu0 0.0
    %1953 = vmatpush1.msra.mxu0 0.0
    %1954 = vmatprep.subr.mxu0 0.0
    %1955 = vmatpush1.msra.mxu0 0.0
    %1956 = vmatprep.subr.mxu0 0.0
    %1957 = vmatpush1.msra.mxu0 0.0
    %1958 = vmatprep.subr.mxu0 0.0
    %1959 = vmatpush1.msra.mxu0 0.0
    %1960 = vmatprep.subr.mxu0 0.0
    %1961 = vmatpush1.msra.mxu0 0.0
    %1962 = vmatprep.subr.mxu0 0.0
    %1963 = vmatpush1.msra.mxu0 0.0
    %1964 = vmatprep.subr.mxu0 0.0
    %1965 = vmatpush1.msra.mxu0 0.0
    %1966 = vmatprep.subr.mxu0 0.0
    %1967 = vmatpush1.msra.mxu0 0.0
    %1968 = vmatprep.subr.mxu0 0.0
    %1969 = vmatpush1.msra.mxu0 0.0
    %1970 = vmatprep.subr.mxu0 0.0
    %1971 = vmatpush1.msra.mxu0 0.0
    %1972 = vmatprep.subr.mxu0 0.0
    %1973 = vmatpush1.msra.mxu0 0.0
    %1974 = vmatprep.subr.mxu0 0.0
    %1975 = vmatpush1.msra.mxu0 0.0
    %1976 = vmatprep.subr.mxu0 0.0
    %1977 = vmatpush1.msra.mxu0 0.0
    %1978 = vmatprep.subr.mxu0 0.0
    %1979 = vmatpush1.msra.mxu0 0.0
    %1980 = vmatprep.mubr.f32.mxu0 0.0
    %1981 = vmatmul.mubr.f32.gmra.mrb[0].mxu0 %v1844
    %v1982 = vpop.f32.mrb[0].mxu0
    %v1983 = vadd.f32 0.0, %v1982
    %v1984 = vpop.f32.mrb[0].mxu0
    %1985 = vdwg.mxu0
    %v1987 = vrot.slane %v1913, 4
    %v1989 = vadd.f32 %v190, %v1987
    %v1990 = vxor.u32 %v1989, 2147483648
    %v1991 = vmul.f32 %v1990, 1.442695
    %v1992 = vpow.pop %v1991
    %v1993 = vadd.f32 %v1992, 1.0
    %v1994 = vrcp.pop %v1993
    %v1995 = vmul.f32 1.0, %v1994
    %v1997 = vrot.slane %v1983, 4
    %1998 = vrot.lane.b32.xlu0 %v1997, 32
    %v1999 = vpop.permute.xlu0 %1998
    %v2001 = vadd.f32 %v190, %v1999
    %v2002 = vxor.u32 %v2001, 2147483648
    %v2003 = vmul.f32 %v2002, 1.442695
    %v2004 = vpow.pop %v2003
    %v2005 = vadd.f32 %v2004, 1.0
    %v2006 = vrcp.pop %v2005
    %v2007 = vmul.f32 1.0, %v2006
    %2008 = vmatprep.subr.mxu0 0.0
    %2009 = vmatpush1.msra.mxu0 %v201
    %2010 = vmatprep.subr.mxu0 0.0
    %2011 = vmatpush1.msra.mxu0 %v202
    %2012 = vmatprep.subr.mxu0 0.0
    %2013 = vmatpush1.msra.mxu0 %v203
    %2014 = vmatprep.subr.mxu0 0.0
    %2015 = vmatpush1.msra.mxu0 %v204
    %2016 = vmatprep.subr.mxu0 0.0
    %2017 = vmatpush1.msra.mxu0 0.0
    %2018 = vmatprep.subr.mxu0 0.0
    %2019 = vmatpush1.msra.mxu0 0.0
    %2020 = vmatprep.subr.mxu0 0.0
    %2021 = vmatpush1.msra.mxu0 0.0
    %2022 = vmatprep.subr.mxu0 0.0
    %2023 = vmatpush1.msra.mxu0 0.0
    %2024 = vmatprep.subr.mxu0 0.0
    %2025 = vmatpush1.msra.mxu0 0.0
    %2026 = vmatprep.subr.mxu0 0.0
    %2027 = vmatpush1.msra.mxu0 0.0
    %2028 = vmatprep.subr.mxu0 0.0
    %2029 = vmatpush1.msra.mxu0 0.0
    %2030 = vmatprep.subr.mxu0 0.0
    %2031 = vmatpush1.msra.mxu0 0.0
    %2032 = vmatprep.subr.mxu0 0.0
    %2033 = vmatpush1.msra.mxu0 0.0
    %2034 = vmatprep.subr.mxu0 0.0
    %2035 = vmatpush1.msra.mxu0 0.0
    %2036 = vmatprep.subr.mxu0 0.0
    %2037 = vmatpush1.msra.mxu0 0.0
    %2038 = vmatprep.subr.mxu0 0.0
    %2039 = vmatpush1.msra.mxu0 0.0
    %2040 = vmatprep.subr.mxu0 0.0
    %2041 = vmatpush1.msra.mxu0 0.0
    %2042 = vmatprep.subr.mxu0 0.0
    %2043 = vmatpush1.msra.mxu0 0.0
    %2044 = vmatprep.subr.mxu0 0.0
    %2045 = vmatpush1.msra.mxu0 0.0
    %2046 = vmatprep.subr.mxu0 0.0
    %2047 = vmatpush1.msra.mxu0 0.0
    %2048 = vmatprep.subr.mxu0 0.0
    %2049 = vmatpush1.msra.mxu0 0.0
    %2050 = vmatprep.subr.mxu0 0.0
    %2051 = vmatpush1.msra.mxu0 0.0
    %2052 = vmatprep.subr.mxu0 0.0
    %2053 = vmatpush1.msra.mxu0 0.0
    %2054 = vmatprep.subr.mxu0 0.0
    %2055 = vmatpush1.msra.mxu0 0.0
    %2056 = vmatprep.subr.mxu0 0.0
    %2057 = vmatpush1.msra.mxu0 0.0
    %2058 = vmatprep.subr.mxu0 0.0
    %2059 = vmatpush1.msra.mxu0 0.0
    %2060 = vmatprep.subr.mxu0 0.0
    %2061 = vmatpush1.msra.mxu0 0.0
    %2062 = vmatprep.subr.mxu0 0.0
    %2063 = vmatpush1.msra.mxu0 0.0
    %2064 = vmatprep.subr.mxu0 0.0
    %2065 = vmatpush1.msra.mxu0 0.0
    %2066 = vmatprep.subr.mxu0 0.0
    %2067 = vmatpush1.msra.mxu0 0.0
    %2068 = vmatprep.subr.mxu0 0.0
    %2069 = vmatpush1.msra.mxu0 0.0
    %2070 = vmatprep.subr.mxu0 0.0
    %2071 = vmatpush1.msra.mxu0 0.0
    %2072 = vmatprep.mubr.f32.mxu0 0.0
    %2073 = vmatmul.mubr.f32.gmra.mrb[0].mxu0 %v1844
    %v2074 = vpop.f32.mrb[0].mxu0
    %v2075 = vadd.f32 %v371, %v2074
    %v2076 = vpop.f32.mrb[0].mxu0
    %2077 = vdwg.mxu0
    %v2079 = vrot.slane %v2075, 4
    %v2081 = vmul.f32 %v1995, %v2079
    %2083 = vrot.lane.b32.xlu0 %v2081, 64
    %v2084 = vpop.permute.xlu0 %2083
    %v2086 = vadd.f32 %v190, %v2084
    %v2087 = vtanh.pop %v2086
    %v2089 = vrot.slane %v2087, 2
    %v2091 = vsub.f32 %v1827, %v2089
    %v2093 = vrot.slane %v2091, 6
    %2094 = vrot.lane.b32.xlu0 %v2093, 96
    %v2095 = vpop.permute.xlu0 %2094
    %v2097 = vmul.f32 %v2007, %v2095
    %2099 = vrot.lane.b32.xlu0 %v2097, 32
    %v2100 = vpop.permute.xlu0 %2099
    %v2102 = vadd.f32 %v2087, %v2100
    %v2104 = vcombine.high %v2102, %v2102
    %v2106 = vunpack.c.l.s4 1983009808
    %v2107 = vunpack.c.0.s8 %v2106
    %v2108 = vlaneseq
    %v2109 = vshrl.u32 %v2108, 7
    %v2110 = vsub.s32 %v2107, %v2109
    %v2111 = vrot.slane %v2104, %v2110
    %2113 = vst.msk [vmem:[#allocation11 + $0x2] sm:$0x3] %vm1021, %v2111
    %v2114 = vrot.slane %v2102, 4
    %2115 = vrot.lane.b32.xlu0 %v2114, 64
    %v2116 = vpop.permute.xlu0 %2115
    %v2117 = vsel %vm111, %v2116, 0
    %2119 = vmatprep.subr.mxu0 0.0
    %2120 = vmatpush1.msra.mxu0 %v193
    %2121 = vmatprep.subr.mxu0 0.0
    %2122 = vmatpush1.msra.mxu0 %v194
    %2123 = vmatprep.subr.mxu0 0.0
    %2124 = vmatpush1.msra.mxu0 %v195
    %2125 = vmatprep.subr.mxu0 0.0
    %2126 = vmatpush1.msra.mxu0 %v196
    %2127 = vmatprep.subr.mxu0 0.0
    %2128 = vmatpush1.msra.mxu0 0.0
    %2129 = vmatprep.subr.mxu0 0.0
    %2130 = vmatpush1.msra.mxu0 0.0
    %2131 = vmatprep.subr.mxu0 0.0
    %2132 = vmatpush1.msra.mxu0 0.0
    %2133 = vmatprep.subr.mxu0 0.0
    %2134 = vmatpush1.msra.mxu0 0.0
    %2135 = vmatprep.subr.mxu0 0.0
    %2136 = vmatpush1.msra.mxu0 0.0
    %2137 = vmatprep.subr.mxu0 0.0
    %2138 = vmatpush1.msra.mxu0 0.0
    %2139 = vmatprep.subr.mxu0 0.0
    %2140 = vmatpush1.msra.mxu0 0.0
    %2141 = vmatprep.subr.mxu0 0.0
    %2142 = vmatpush1.msra.mxu0 0.0
    %2143 = vmatprep.subr.mxu0 0.0
    %2144 = vmatpush1.msra.mxu0 0.0
    %2145 = vmatprep.subr.mxu0 0.0
    %2146 = vmatpush1.msra.mxu0 0.0
    %2147 = vmatprep.subr.mxu0 0.0
    %2148 = vmatpush1.msra.mxu0 0.0
    %2149 = vmatprep.subr.mxu0 0.0
    %2150 = vmatpush1.msra.mxu0 0.0
    %2151 = vmatprep.subr.mxu0 0.0
    %2152 = vmatpush1.msra.mxu0 0.0
    %2153 = vmatprep.subr.mxu0 0.0
    %2154 = vmatpush1.msra.mxu0 0.0
    %2155 = vmatprep.subr.mxu0 0.0
    %2156 = vmatpush1.msra.mxu0 0.0
    %2157 = vmatprep.subr.mxu0 0.0
    %2158 = vmatpush1.msra.mxu0 0.0
    %2159 = vmatprep.subr.mxu0 0.0
    %2160 = vmatpush1.msra.mxu0 0.0
    %2161 = vmatprep.subr.mxu0 0.0
    %2162 = vmatpush1.msra.mxu0 0.0
    %2163 = vmatprep.subr.mxu0 0.0
    %2164 = vmatpush1.msra.mxu0 0.0
    %2165 = vmatprep.subr.mxu0 0.0
    %2166 = vmatpush1.msra.mxu0 0.0
    %2167 = vmatprep.subr.mxu0 0.0
    %2168 = vmatpush1.msra.mxu0 0.0
    %2169 = vmatprep.subr.mxu0 0.0
    %2170 = vmatpush1.msra.mxu0 0.0
    %2171 = vmatprep.subr.mxu0 0.0
    %2172 = vmatpush1.msra.mxu0 0.0
    %2173 = vmatprep.subr.mxu0 0.0
    %2174 = vmatpush1.msra.mxu0 0.0
    %2175 = vmatprep.subr.mxu0 0.0
    %2176 = vmatpush1.msra.mxu0 0.0
    %2177 = vmatprep.subr.mxu0 0.0
    %2178 = vmatpush1.msra.mxu0 0.0
    %2179 = vmatprep.subr.mxu0 0.0
    %2180 = vmatpush1.msra.mxu0 0.0
    %2181 = vmatprep.subr.mxu0 0.0
    %2182 = vmatpush1.msra.mxu0 0.0
    %2183 = vmatprep.mubr.f32.mxu0 0.0
    %2184 = vmatmul.mubr.f32.gmra.mrb[0].mxu0 %v2117
    %v2185 = vpop.f32.mrb[0].mxu0
    %v2186 = vadd.f32 0.0, %v2185
    %v2187 = vpop.f32.mrb[0].mxu0
    %2188 = vdwg.mxu0
    %2189 = vmatprep.subr.mxu0 0.0
    %2190 = vmatpush1.msra.mxu0 %v197
    %2191 = vmatprep.subr.mxu0 0.0
    %2192 = vmatpush1.msra.mxu0 %v198
    %2193 = vmatprep.subr.mxu0 0.0
    %2194 = vmatpush1.msra.mxu0 %v199
    %2195 = vmatprep.subr.mxu0 0.0
    %2196 = vmatpush1.msra.mxu0 %v200
    %2197 = vmatprep.subr.mxu0 0.0
    %2198 = vmatpush1.msra.mxu0 0.0
    %2199 = vmatprep.subr.mxu0 0.0
    %2200 = vmatpush1.msra.mxu0 0.0
    %2201 = vmatprep.subr.mxu0 0.0
    %2202 = vmatpush1.msra.mxu0 0.0
    %2203 = vmatprep.subr.mxu0 0.0
    %2204 = vmatpush1.msra.mxu0 0.0
    %2205 = vmatprep.subr.mxu0 0.0
    %2206 = vmatpush1.msra.mxu0 0.0
    %2207 = vmatprep.subr.mxu0 0.0
    %2208 = vmatpush1.msra.mxu0 0.0
    %2209 = vmatprep.subr.mxu0 0.0
    %2210 = vmatpush1.msra.mxu0 0.0
    %2211 = vmatprep.subr.mxu0 0.0
    %2212 = vmatpush1.msra.mxu0 0.0
    %2213 = vmatprep.subr.mxu0 0.0
    %2214 = vmatpush1.msra.mxu0 0.0
    %2215 = vmatprep.subr.mxu0 0.0
    %2216 = vmatpush1.msra.mxu0 0.0
    %2217 = vmatprep.subr.mxu0 0.0
    %2218 = vmatpush1.msra.mxu0 0.0
    %2219 = vmatprep.subr.mxu0 0.0
    %2220 = vmatpush1.msra.mxu0 0.0
    %2221 = vmatprep.subr.mxu0 0.0
    %2222 = vmatpush1.msra.mxu0 0.0
    %2223 = vmatprep.subr.mxu0 0.0
    %2224 = vmatpush1.msra.mxu0 0.0
    %2225 = vmatprep.subr.mxu0 0.0
    %2226 = vmatpush1.msra.mxu0 0.0
    %2227 = vmatprep.subr.mxu0 0.0
    %2228 = vmatpush1.msra.mxu0 0.0
    %2229 = vmatprep.subr.mxu0 0.0
    %2230 = vmatpush1.msra.mxu0 0.0
    %2231 = vmatprep.subr.mxu0 0.0
    %2232 = vmatpush1.msra.mxu0 0.0
    %2233 = vmatprep.subr.mxu0 0.0
    %2234 = vmatpush1.msra.mxu0 0.0
    %2235 = vmatprep.subr.mxu0 0.0
    %2236 = vmatpush1.msra.mxu0 0.0
    %2237 = vmatprep.subr.mxu0 0.0
    %2238 = vmatpush1.msra.mxu0 0.0
    %2239 = vmatprep.subr.mxu0 0.0
    %2240 = vmatpush1.msra.mxu0 0.0
    %2241 = vmatprep.subr.mxu0 0.0
    %2242 = vmatpush1.msra.mxu0 0.0
    %2243 = vmatprep.subr.mxu0 0.0
    %2244 = vmatpush1.msra.mxu0 0.0
    %2245 = vmatprep.subr.mxu0 0.0
    %2246 = vmatpush1.msra.mxu0 0.0
    %2247 = vmatprep.subr.mxu0 0.0
    %2248 = vmatpush1.msra.mxu0 0.0
    %2249 = vmatprep.subr.mxu0 0.0
    %2250 = vmatpush1.msra.mxu0 0.0
    %2251 = vmatprep.subr.mxu0 0.0
    %2252 = vmatpush1.msra.mxu0 0.0
    %2253 = vmatprep.mubr.f32.mxu0 0.0
    %2254 = vmatmul.mubr.f32.gmra.mrb[0].mxu0 %v2117
    %v2255 = vpop.f32.mrb[0].mxu0
    %v2256 = vadd.f32 0.0, %v2255
    %v2257 = vpop.f32.mrb[0].mxu0
    %2258 = vdwg.mxu0
    %v2260 = vrot.slane %v2186, 2
    %v2262 = vadd.f32 %v190, %v2260
    %v2263 = vxor.u32 %v2262, 2147483648
    %v2264 = vmul.f32 %v2263, 1.442695
    %v2265 = vpow.pop %v2264
    %v2266 = vadd.f32 %v2265, 1.0
    %v2267 = vrcp.pop %v2266
    %v2268 = vmul.f32 1.0, %v2267
    %v2270 = vrot.slane %v2256, 2
    %2271 = vrot.lane.b32.xlu0 %v2270, 32
    %v2272 = vpop.permute.xlu0 %2271
    %v2274 = vadd.f32 %v190, %v2272
    %v2275 = vxor.u32 %v2274, 2147483648
    %v2276 = vmul.f32 %v2275, 1.442695
    %v2277 = vpow.pop %v2276
    %v2278 = vadd.f32 %v2277, 1.0
    %v2279 = vrcp.pop %v2278
    %v2280 = vmul.f32 1.0, %v2279
    %2281 = vmatprep.subr.mxu0 0.0
    %2282 = vmatpush1.msra.mxu0 %v201
    %2283 = vmatprep.subr.mxu0 0.0
    %2284 = vmatpush1.msra.mxu0 %v202
    %2285 = vmatprep.subr.mxu0 0.0
    %2286 = vmatpush1.msra.mxu0 %v203
    %2287 = vmatprep.subr.mxu0 0.0
    %2288 = vmatpush1.msra.mxu0 %v204
    %2289 = vmatprep.subr.mxu0 0.0
    %2290 = vmatpush1.msra.mxu0 0.0
    %2291 = vmatprep.subr.mxu0 0.0
    %2292 = vmatpush1.msra.mxu0 0.0
    %2293 = vmatprep.subr.mxu0 0.0
    %2294 = vmatpush1.msra.mxu0 0.0
    %2295 = vmatprep.subr.mxu0 0.0
    %2296 = vmatpush1.msra.mxu0 0.0
    %2297 = vmatprep.subr.mxu0 0.0
    %2298 = vmatpush1.msra.mxu0 0.0
    %2299 = vmatprep.subr.mxu0 0.0
    %2300 = vmatpush1.msra.mxu0 0.0
    %2301 = vmatprep.subr.mxu0 0.0
    %2302 = vmatpush1.msra.mxu0 0.0
    %2303 = vmatprep.subr.mxu0 0.0
    %2304 = vmatpush1.msra.mxu0 0.0
    %2305 = vmatprep.subr.mxu0 0.0
    %2306 = vmatpush1.msra.mxu0 0.0
    %2307 = vmatprep.subr.mxu0 0.0
    %2308 = vmatpush1.msra.mxu0 0.0
    %2309 = vmatprep.subr.mxu0 0.0
    %2310 = vmatpush1.msra.mxu0 0.0
    %2311 = vmatprep.subr.mxu0 0.0
    %2312 = vmatpush1.msra.mxu0 0.0
    %2313 = vmatprep.subr.mxu0 0.0
    %2314 = vmatpush1.msra.mxu0 0.0
    %2315 = vmatprep.subr.mxu0 0.0
    %2316 = vmatpush1.msra.mxu0 0.0
    %2317 = vmatprep.subr.mxu0 0.0
    %2318 = vmatpush1.msra.mxu0 0.0
    %2319 = vmatprep.subr.mxu0 0.0
    %2320 = vmatpush1.msra.mxu0 0.0
    %2321 = vmatprep.subr.mxu0 0.0
    %2322 = vmatpush1.msra.mxu0 0.0
    %2323 = vmatprep.subr.mxu0 0.0
    %2324 = vmatpush1.msra.mxu0 0.0
    %2325 = vmatprep.subr.mxu0 0.0
    %2326 = vmatpush1.msra.mxu0 0.0
    %2327 = vmatprep.subr.mxu0 0.0
    %2328 = vmatpush1.msra.mxu0 0.0
    %2329 = vmatprep.subr.mxu0 0.0
    %2330 = vmatpush1.msra.mxu0 0.0
    %2331 = vmatprep.subr.mxu0 0.0
    %2332 = vmatpush1.msra.mxu0 0.0
    %2333 = vmatprep.subr.mxu0 0.0
    %2334 = vmatpush1.msra.mxu0 0.0
    %2335 = vmatprep.subr.mxu0 0.0
    %2336 = vmatpush1.msra.mxu0 0.0
    %2337 = vmatprep.subr.mxu0 0.0
    %2338 = vmatpush1.msra.mxu0 0.0
    %2339 = vmatprep.subr.mxu0 0.0
    %2340 = vmatpush1.msra.mxu0 0.0
    %2341 = vmatprep.subr.mxu0 0.0
    %2342 = vmatpush1.msra.mxu0 0.0
    %2343 = vmatprep.subr.mxu0 0.0
    %2344 = vmatpush1.msra.mxu0 0.0
    %2345 = vmatprep.mubr.f32.mxu0 0.0
    %2346 = vmatmul.mubr.f32.gmra.mrb[0].mxu0 %v2117
    %v2347 = vpop.f32.mrb[0].mxu0
    %v2348 = vadd.f32 %v371, %v2347
    %v2349 = vpop.f32.mrb[0].mxu0
    %2350 = vdwg.mxu0
    %v2352 = vrot.slane %v2348, 2
    %v2354 = vmul.f32 %v2268, %v2352
    %2356 = vrot.lane.b32.xlu0 %v2354, 64
    %v2357 = vpop.permute.xlu0 %2356
    %v2359 = vadd.f32 %v190, %v2357
    %v2360 = vtanh.pop %v2359
    %v2362 = vrot.slane %v2360, 2
    %v2364 = vsub.f32 %v2102, %v2362
    %v2366 = vrot.slane %v2364, 6
    %2367 = vrot.lane.b32.xlu0 %v2366, 96
    %v2368 = vpop.permute.xlu0 %2367
    %v2370 = vmul.f32 %v2280, %v2368
    %2372 = vrot.lane.b32.xlu0 %v2370, 32
    %v2373 = vpop.permute.xlu0 %2372
    %v2375 = vadd.f32 %v2360, %v2373
    %v2377 = vcombine.high %v2375, %v2375
    %v2379 = vunpack.c.l.s4 1983009808
    %v2380 = vunpack.c.0.s8 %v2379
    %v2381 = vlaneseq
    %v2382 = vshrl.u32 %v2381, 7
    %v2383 = vsub.s32 %v2380, %v2382
    %v2384 = vrot.slane %v2377, %v2383
    %v2385 = vcombine.high %v2384, %v2384
    %2386 = vrot.lane.b32.xlu0 %v2385, 32
    %v2387 = vpop.permute.xlu0 %2386
    %2389 = vst.msk [vmem:[#allocation11 + $0x2] sm:$0x3] %vm1298, %v2387
    %2390 = vrot.lane.b32.xlu0 %v2375, 64
    %v2391 = vpop.permute.xlu0 %2390
    %vm2393 = vcmask 261126
    %2394 = vst.msk [vmem:[#allocation12 - $0x6] sm:$0xc0] %vm2393, %v2391
    // Predicated region
    $region50: #{tpu_custom_call.1} parent=1 // pred_check
      _
    $region51: #{tpu_custom_call.1} parent=1 // pred_check_branch
      %2396 = sbr.rel (0) target = $region53
    $region52: #{tpu_custom_call.1} parent=1 // pred_region
      %s2398 = ssub.s32 64, 64
      %2399 = vsyncadd [#allocation4], %s2398
      %s2401 = sshll.u32 [#allocation11], 4
      %s2402 = int_to_ptr.vmem [resolvable:$true] %s2401
      %2404 = dma.vmem_to_hbm [thread:$0]  %s2402, 64, %s7, [#allocation4]
    $region53: #{tpu_custom_call.1} parent=1 // pred_fallthru
      _
    // Predicated region
    $region54: #{tpu_custom_call.1} parent=1 // pred_check
      _
    $region55: #{tpu_custom_call.1} parent=1 // pred_check_branch
      %2406 = sbr.rel (0) target = $region57
    $region56: #{tpu_custom_call.1} parent=1 // pred_region
      %s2408 = ssub.s32 32, 32
      %2409 = vsyncadd [#allocation13], %s2408
      %s2411 = sshll.u32 [#allocation12], 4
      %s2412 = int_to_ptr.vmem [resolvable:$true] %s2411
      %2414 = dma.vmem_to_hbm [thread:$0]  %s2412, 32, %s8, [#allocation13]
    $region57: #{tpu_custom_call.1} parent=1 // pred_fallthru
      _
    // Predicated region
    $region58: #{tpu_custom_call.1} parent=1 // pred_check
      _
    $region59: #{tpu_custom_call.1} parent=1 // pred_check_branch
      %2416 = sbr.rel (0) target = $region61
    $region60: #{tpu_custom_call.1} parent=1 // pred_region
      %2417 = dma.done [#allocation4], 64
    $region61: #{tpu_custom_call.1} parent=1 // pred_fallthru
      _
    // Predicated region
    $region62: #{tpu_custom_call.1} parent=1 // pred_check
      _
    $region63: #{tpu_custom_call.1} parent=1 // pred_check_branch
      %2419 = sbr.rel (0) target = $region65
    $region64: #{tpu_custom_call.1} parent=1 // pred_region
      %2420 = dma.done [#allocation13], 32
    $region65: #{tpu_custom_call.1} parent=1 // pred_fallthru
      _
    %2421 = vsyncpa [#allocation3], 1
    %2422 = vsyncpa [#allocation6], 1
    %2423 = vsyncpa [#allocation9], 1
    %2424 = vsyncpa [#allocation4], 1
    %2425 = vsyncpa [#allocation13], 1

</llo_original>
